<compile_context>
chip_gen: v7x
topology: tpu7x:2x2x1
jax: 0.10.0
libtpu: 0.0.40
codegen_flags: <defaults>
</compile_context>

<pallas_src>
import jax
import jax.numpy as jnp
from jax import lax
from jax.experimental import pallas as pl
from jax.experimental.pallas import tpu as pltpu
import numpy as np

# ---------------- model config (small, consistent with the module) -----------
BATCH = 2
SEQ = 8
INPUT_SIZE = 4
HIDDEN_SIZE = 32
NUM_LAYERS = 2          # kernel below is specialized for 2 layers
OUTPUT_SIZE = 1

# MXU operand dtype (accumulation is always f32).  f32 by default for parity
# with a PyTorch f32 LSTM; set to jnp.bfloat16 for bf16 MXU operands.
MATMUL_DTYPE = jnp.float32

_SECT_ALIGN = 16   # slab sections 16-row aligned: whole (8,128) f32 / (16,128) bf16 tiles


def _round_up(n, m):
    return ((n + m - 1) // m) * m


def lstm_kernel(x_ref,    # (S*B, In_pad) f32, time-major rows t*B + b
                w_ref,    # (In_pad + 3H, 4H) MATMUL_DTYPE weight slab:
                          #   rows [0:In_pad]          Wih0.T (rows >= In zero)
                          #   rows [In_pad:+H]         Whh0.T
                          #   rows [In_pad+H:+2H]      Wih1.T
                          #   rows [In_pad+2H:+3H]     Whh1.T
                fb_ref,   # (8, 4H) f32 bias/fc slab: row0 b0, row1 b1,
                          #   rows 2:2+Out wfc (lanes 0:H), row 2+Out bfc (lanes 0:Out)
                out_ref): # (B, Out) f32
    B, Out = out_ref.shape
    SB, In = x_ref.shape
    S = SB // B
    H4 = w_ref.shape[1]
    H = H4 // 4
    mm = w_ref.dtype

    # Static, tile-aligned slices of the packed weight slab (ref views, no copy).
    wih0 = w_ref[0:In, :]
    whh0 = w_ref[In:In + H, :]
    wih1 = w_ref[In + H:In + 2 * H, :]
    whh1 = w_ref[In + 2 * H:In + 3 * H, :]

    # Bias broadcast exactly once (JAX does not CSE broadcast_in_dim).
    b1b = jnp.broadcast_to(fb_ref[1:2, :], (B, H4))

    # ---- Hoisted layer-0 input projection (no sequential dependence), b0 folded in.
    xproj = (jnp.dot(x_ref[...].astype(mm), wih0,
                     preferred_element_type=jnp.float32)
             + jnp.broadcast_to(fb_ref[0:1, :], (SB, H4)))        # (S*B, 4H) f32

    def gates(z):
        # sigmoid(z) == 0.5*tanh(0.5*z) + 0.5 exactly: two single-op EUP pushes
        # per gates() call (no exp + precise divide), full (B,4H) width each.
        sig = 0.5 * jnp.tanh(0.5 * z) + 0.5
        tg = jnp.tanh(z)
        return (sig[:, 0 * H:1 * H],     # i
                sig[:, 1 * H:2 * H],     # f
                tg[:, 2 * H:3 * H],      # g
                sig[:, 3 * H:4 * H])     # o

    zero = jnp.zeros((B, H), jnp.float32)
    h0, c0, h1, c1 = zero, zero, zero, zero

    # Fully unrolled time loop (S is small & static): gives the scheduler
    # cross-timestep visibility to interleave MXU / EUP / VPU work.
    # TODO(synk): further serial-chain cut: hold whh0/whh1 resident in the MXU
    # across the loop via pltpu.matmul_push_rhs / matmul_acc_lhs / matmul_pop,
    # and on v6e/v7x use a (2H, 8H) block-diagonal recurrent weight (fills the
    # 256-wide MXU); skipped here to keep a single, known-good code path.
    for t in range(S):
        # Both recurrent dots depend only on the previous step's state, so they
        # issue back-to-back at the top of the step; rec1 is off the h0 chain.
        rec0 = jnp.dot(h0.astype(mm), whh0, preferred_element_type=jnp.float32)
        rec1 = jnp.dot(h1.astype(mm), whh1, preferred_element_type=jnp.float32)

        # Layer 0
        z0 = xproj[t * B:(t + 1) * B, :] + rec0
        i0, f0, g0, o0 = gates(z0)
        c0 = f0 * c0 + i0 * g0
        h0 = o0 * jnp.tanh(c0)

        # Layer 1: only the fresh-h0 input projection sits behind h0(t).
        z1 = jnp.dot(h0.astype(mm), wih1, preferred_element_type=jnp.float32) + rec1 + b1b
        i1, f1, g1, o1 = gates(z1)
        c1 = f1 * c1 + i1 * g1
        h1 = o1 * jnp.tanh(c1)

    # Final Linear on the last timestep's top-layer hidden state.
    bfc = fb_ref[2 + Out:3 + Out, 0:Out]                 # (1, Out)
    if Out == 1:
        # Out == 1: an MXU dot would be one more push/drain latency at ~0.1%
        # utilization; a VPU multiply + lane reduction is cheaper.
        wfc = fb_ref[2:3, 0:H]                           # (1, H)
        out = jnp.sum(h1 * wfc, axis=-1, keepdims=True) + bfc
    else:
        wfc = fb_ref[2:2 + Out, 0:H]                     # (Out, H)
        out = lax.dot_general(h1, wfc, (((1,), (1,)), ((), ())),
                              preferred_element_type=jnp.float32) + bfc
    out_ref[...] = out.astype(out_ref.dtype)


def prepare_params(params, mm_dtype=MATMUL_DTYPE):
    """One-time (model-load) packing: 8 tiny tensors -> 2 slabs (2 DMAs/call)."""
    wih0, whh0, b0, wih1, whh1, b1, wfc, bfc = params
    H = whh0.shape[1]
    In = wih0.shape[1]
    Out = wfc.shape[0]
    assert H % _SECT_ALIGN == 0, "hidden size must keep slab sections tile-aligned"
    In_pad = _round_up(max(In, _SECT_ALIGN), _SECT_ALIGN)

    # Weight slab (matmul dtype): [Wih0.T(pad) ; Whh0.T ; Wih1.T ; Whh1.T].
    w_slab = jnp.zeros((In_pad + 3 * H, 4 * H), mm_dtype)
    w_slab = w_slab.at[0:In, :].set(wih0.T.astype(mm_dtype))
    w_slab = w_slab.at[In_pad:In_pad + H, :].set(whh0.T.astype(mm_dtype))
    w_slab = w_slab.at[In_pad + H:In_pad + 2 * H, :].set(wih1.T.astype(mm_dtype))
    w_slab = w_slab.at[In_pad + 2 * H:In_pad + 3 * H, :].set(whh1.T.astype(mm_dtype))

    # Bias / fc slab (f32): rows [b0; b1; wfc (Out rows, lanes 0:H); bfc].
    n_rows = _round_up(3 + Out, 8)
    fb_slab = jnp.zeros((n_rows, 4 * H), jnp.float32)
    fb_slab = fb_slab.at[0, :].set(b0.reshape(-1).astype(jnp.float32))
    fb_slab = fb_slab.at[1, :].set(b1.reshape(-1).astype(jnp.float32))
    fb_slab = fb_slab.at[2:2 + Out, 0:H].set(wfc.astype(jnp.float32))
    fb_slab = fb_slab.at[2 + Out, 0:Out].set(bfc.reshape(-1).astype(jnp.float32))

    return {"w_slab": w_slab, "fb_slab": fb_slab,
            "H": H, "In": In, "In_pad": In_pad, "Out": Out}


def lstm_model_forward(x_bsi, prepped):
    """x_bsi: (batch, seq, input) f32, PyTorch batch_first.  Returns (batch, output)."""
    B, S, In = x_bsi.shape
    In_pad, Out = prepped["In_pad"], prepped["Out"]

    # Per-call prep: only the tiny time-major flatten (rows t*B + b) + zero pad.
    x_flat = jnp.transpose(x_bsi, (1, 0, 2)).reshape(S * B, In)
    x_pad = jnp.pad(x_flat, ((0, 0), (0, In_pad - In)))

    vmem = pl.BlockSpec(memory_space=pltpu.MemorySpace.VMEM)
    # TODO(synk): if this is ever called with many sequences per step, add a
    # leading batch grid axis (weight BlockSpecs with index_map=lambda i: (0, 0)
    # so the slabs are DMA'd once per call) and, on v7x, set
    # compiler_params=pltpu.CompilerParams(dimension_semantics=("parallel",)) to
    # shard over both TensorCores; at B=2 a grid only adds per-step overhead.
    return pl.pallas_call(
        lstm_kernel,
        out_shape=jax.ShapeDtypeStruct((B, Out), jnp.float32),
        in_specs=[vmem, vmem, vmem],
        out_specs=vmem,
    )(x_pad, prepped["w_slab"], prepped["fb_slab"])


def init_params(key, input_size, hidden_size, output_size):
    """Deterministic init mirroring PyTorch shapes (uniform +/- 1/sqrt(H))."""
    H = hidden_size
    k = 1.0 / np.sqrt(H)
    keys = jax.random.split(key, 10)
    u = lambda kk, shape: jax.random.uniform(kk, shape, jnp.float32, -k, k)
    wih0 = u(keys[0], (4 * H, input_size))
    whh0 = u(keys[1], (4 * H, H))
    b0 = u(keys[2], (1, 4 * H)) + u(keys[3], (1, 4 * H))   # b_ih + b_hh pre-summed
    wih1 = u(keys[4], (4 * H, H))
    whh1 = u(keys[5], (4 * H, H))
    b1 = u(keys[6], (1, 4 * H)) + u(keys[7], (1, 4 * H))
    wfc = u(keys[8], (output_size, H))
    bfc = u(keys[9], (1, output_size))
    return (wih0, whh0, b0, wih1, whh1, b1, wfc, bfc)


def _reference_cell(xt, h, c, w_ih, w_hh, b, mm_dtype):
    H = h.shape[-1]
    hp = lax.Precision.HIGHEST
    z = (jnp.dot(xt.astype(mm_dtype), w_ih.T.astype(mm_dtype),
                 preferred_element_type=jnp.float32, precision=hp)
         + jnp.dot(h.astype(mm_dtype), w_hh.T.astype(mm_dtype),
                   preferred_element_type=jnp.float32, precision=hp)
         + b)
    i = jax.nn.sigmoid(z[:, 0 * H:1 * H])
    f = jax.nn.sigmoid(z[:, 1 * H:2 * H])
    g = jnp.tanh(z[:, 2 * H:3 * H])
    o = jax.nn.sigmoid(z[:, 3 * H:4 * H])
    c_new = f * c + i * g
    return o * jnp.tanh(c_new), c_new


def reference_forward(x_bsi, params, mm_dtype=jnp.float32):
    """Pure-JAX reference with PyTorch nn.LSTM semantics (matmul operands in mm_dtype)."""
    (wih0, whh0, b0, wih1, whh1, b1, wfc, bfc) = params
    B = x_bsi.shape[0]
    H = whh0.shape[1]
    h0 = c0 = h1 = c1 = jnp.zeros((B, H), jnp.float32)
    for t in range(x_bsi.shape[1]):
        xt = x_bsi[:, t, :]
        h0, c0 = _reference_cell(xt, h0, c0, wih0, whh0, b0, mm_dtype)
        h1, c1 = _reference_cell(h0, h1, c1, wih1, whh1, b1, mm_dtype)
    return jnp.dot(h1, wfc.T, precision=lax.Precision.HIGHEST) + bfc


if __name__ == "__main__":
    key = jax.random.PRNGKey(0)
    kx, kp = jax.random.split(key)
    x = jax.random.normal(kx, (BATCH, SEQ, INPUT_SIZE), dtype=jnp.float32)
    params = init_params(kp, INPUT_SIZE, HIDDEN_SIZE, OUTPUT_SIZE)

    prepped = prepare_params(params)          # one-time, model-load-side packing
    out = jax.block_until_ready(lstm_model_forward(x, prepped))
    assert out.shape == (BATCH, OUTPUT_SIZE)

    ref_f32 = jax.block_until_ready(reference_forward(x, params, jnp.float32))
    if MATMUL_DTYPE == jnp.float32:
        np.testing.assert_allclose(np.asarray(out), np.asarray(ref_f32),
                                   rtol=2e-3, atol=2e-4)
    else:
        ref_mm = jax.block_until_ready(reference_forward(x, params, MATMUL_DTYPE))
        np.testing.assert_allclose(np.asarray(out), np.asarray(ref_mm),
                                   rtol=5e-3, atol=5e-4)
        np.testing.assert_allclose(np.asarray(out), np.asarray(ref_f32),
                                   rtol=1e-1, atol=5e-2)

    print("KERNEL_OK")
</pallas_src>

<mosaic_0001>
module attributes {stable_mosaic.version = 11 : i64} {
  func.func @lstm_kernel(%arg0: memref<16x16xf32, #tpu.memory_space<vmem>>, %arg1: memref<112x128xf32, #tpu.memory_space<vmem>>, %arg2: memref<8x128xf32, #tpu.memory_space<vmem>>, %arg3: memref<2x1xf32, #tpu.memory_space<vmem>>) attributes {dimension_semantics = [], scalar_prefetch = 0 : i64, scratch_operands = 0 : i64, tpu.core_type = #tpu.core_type<tc>} {
    %c0 = arith.constant 0 : index
    %c0_0 = arith.constant 0 : index
    %0 = vector.load %arg1[%c0, %c0_0] : memref<112x128xf32, #tpu.memory_space<vmem>>, vector<16x128xf32>
    %c16 = arith.constant 16 : index
    %c0_1 = arith.constant 0 : index
    %1 = vector.load %arg1[%c16, %c0_1] : memref<112x128xf32, #tpu.memory_space<vmem>>, vector<32x128xf32>
    %c48 = arith.constant 48 : index
    %c0_2 = arith.constant 0 : index
    %2 = vector.load %arg1[%c48, %c0_2] : memref<112x128xf32, #tpu.memory_space<vmem>>, vector<32x128xf32>
    %c80 = arith.constant 80 : index
    %c0_3 = arith.constant 0 : index
    %3 = vector.load %arg1[%c80, %c0_3] : memref<112x128xf32, #tpu.memory_space<vmem>>, vector<32x128xf32>
    %c1 = arith.constant 1 : index
    %c0_4 = arith.constant 0 : index
    %4 = vector.load %arg2[%c1, %c0_4] : memref<8x128xf32, #tpu.memory_space<vmem>>, vector<1x128xf32>
    %5 = vector.shape_cast %4 : vector<1x128xf32> to vector<1x128xf32>
    %6 = vector.broadcast %5 : vector<1x128xf32> to vector<2x128xf32>
    %c0_5 = arith.constant 0 : index
    %c0_6 = arith.constant 0 : index
    %7 = vector.load %arg0[%c0_5, %c0_6] : memref<16x16xf32, #tpu.memory_space<vmem>>, vector<16x16xf32>
    %cst = arith.constant dense<0.000000e+00> : vector<16x128xf32>
    %8 = tpu.matmul %7, %0, %cst {dimension_numbers = #tpu.dot_dimension_numbers<[1], [0], [0], [1], [0, 0, 1, 1], [], []>} : vector<16x16xf32>, vector<16x128xf32>, vector<16x128xf32> -> vector<16x128xf32>
    %c0_7 = arith.constant 0 : index
    %c0_8 = arith.constant 0 : index
    %9 = vector.load %arg2[%c0_7, %c0_8] : memref<8x128xf32, #tpu.memory_space<vmem>>, vector<1x128xf32>
    %10 = vector.shape_cast %9 : vector<1x128xf32> to vector<1x128xf32>
    %11 = vector.broadcast %10 : vector<1x128xf32> to vector<16x128xf32>
    %12 = arith.addf %8, %11 : vector<16x128xf32>
    %cst_9 = arith.constant 0.000000e+00 : f32
    %13 = vector.broadcast %cst_9 : f32 to vector<2x32xf32>
    %cst_10 = arith.constant dense<0.000000e+00> : vector<2x128xf32>
    %14 = tpu.matmul %13, %1, %cst_10 {dimension_numbers = #tpu.dot_dimension_numbers<[1], [0], [0], [1], [0, 0, 1, 1], [], []>} : vector<2x32xf32>, vector<32x128xf32>, vector<2x128xf32> -> vector<2x128xf32>
    %cst_11 = arith.constant dense<0.000000e+00> : vector<2x128xf32>
    %15 = tpu.matmul %13, %3, %cst_11 {dimension_numbers = #tpu.dot_dimension_numbers<[1], [0], [0], [1], [0, 0, 1, 1], [], []>} : vector<2x32xf32>, vector<32x128xf32>, vector<2x128xf32> -> vector<2x128xf32>
    %16 = vector.extract_strided_slice %12 {offsets = [0, 0], sizes = [2, 128], strides = [1, 1]} : vector<16x128xf32> to vector<2x128xf32>
    %17 = arith.addf %16, %14 : vector<2x128xf32>
    %cst_12 = arith.constant 5.000000e-01 : f32
    %18 = vector.broadcast %cst_12 : f32 to vector<2x128xf32>
    %19 = arith.mulf %18, %17 : vector<2x128xf32>
    %20 = math.tanh %19 : vector<2x128xf32>
    %cst_13 = arith.constant 5.000000e-01 : f32
    %21 = vector.broadcast %cst_13 : f32 to vector<2x128xf32>
    %22 = arith.mulf %21, %20 : vector<2x128xf32>
    %cst_14 = arith.constant 5.000000e-01 : f32
    %23 = vector.broadcast %cst_14 : f32 to vector<2x128xf32>
    %24 = arith.addf %22, %23 : vector<2x128xf32>
    %25 = math.tanh %17 : vector<2x128xf32>
    %26 = vector.extract_strided_slice %24 {offsets = [0, 0], sizes = [2, 32], strides = [1, 1]} : vector<2x128xf32> to vector<2x32xf32>
    %27 = vector.extract_strided_slice %24 {offsets = [0, 32], sizes = [2, 32], strides = [1, 1]} : vector<2x128xf32> to vector<2x32xf32>
    %28 = vector.extract_strided_slice %25 {offsets = [0, 64], sizes = [2, 32], strides = [1, 1]} : vector<2x128xf32> to vector<2x32xf32>
    %29 = vector.extract_strided_slice %24 {offsets = [0, 96], sizes = [2, 32], strides = [1, 1]} : vector<2x128xf32> to vector<2x32xf32>
    %30 = arith.mulf %27, %13 : vector<2x32xf32>
    %31 = arith.mulf %26, %28 : vector<2x32xf32>
    %32 = arith.addf %30, %31 : vector<2x32xf32>
    %33 = math.tanh %32 : vector<2x32xf32>
    %34 = arith.mulf %29, %33 : vector<2x32xf32>
    %cst_15 = arith.constant dense<0.000000e+00> : vector<2x128xf32>
    %35 = tpu.matmul %34, %2, %cst_15 {dimension_numbers = #tpu.dot_dimension_numbers<[1], [0], [0], [1], [0, 0, 1, 1], [], []>} : vector<2x32xf32>, vector<32x128xf32>, vector<2x128xf32> -> vector<2x128xf32>
    %36 = arith.addf %35, %15 : vector<2x128xf32>
    %37 = arith.addf %36, %6 : vector<2x128xf32>
    %cst_16 = arith.constant 5.000000e-01 : f32
    %38 = vector.broadcast %cst_16 : f32 to vector<2x128xf32>
    %39 = arith.mulf %38, %37 : vector<2x128xf32>
    %40 = math.tanh %39 : vector<2x128xf32>
    %cst_17 = arith.constant 5.000000e-01 : f32
    %41 = vector.broadcast %cst_17 : f32 to vector<2x128xf32>
    %42 = arith.mulf %41, %40 : vector<2x128xf32>
    %cst_18 = arith.constant 5.000000e-01 : f32
    %43 = vector.broadcast %cst_18 : f32 to vector<2x128xf32>
    %44 = arith.addf %42, %43 : vector<2x128xf32>
    %45 = math.tanh %37 : vector<2x128xf32>
    %46 = vector.extract_strided_slice %44 {offsets = [0, 0], sizes = [2, 32], strides = [1, 1]} : vector<2x128xf32> to vector<2x32xf32>
    %47 = vector.extract_strided_slice %44 {offsets = [0, 32], sizes = [2, 32], strides = [1, 1]} : vector<2x128xf32> to vector<2x32xf32>
    %48 = vector.extract_strided_slice %45 {offsets = [0, 64], sizes = [2, 32], strides = [1, 1]} : vector<2x128xf32> to vector<2x32xf32>
    %49 = vector.extract_strided_slice %44 {offsets = [0, 96], sizes = [2, 32], strides = [1, 1]} : vector<2x128xf32> to vector<2x32xf32>
    %50 = arith.mulf %47, %13 : vector<2x32xf32>
    %51 = arith.mulf %46, %48 : vector<2x32xf32>
    %52 = arith.addf %50, %51 : vector<2x32xf32>
    %53 = math.tanh %52 : vector<2x32xf32>
    %54 = arith.mulf %49, %53 : vector<2x32xf32>
    %cst_19 = arith.constant dense<0.000000e+00> : vector<2x128xf32>
    %55 = tpu.matmul %34, %1, %cst_19 {dimension_numbers = #tpu.dot_dimension_numbers<[1], [0], [0], [1], [0, 0, 1, 1], [], []>} : vector<2x32xf32>, vector<32x128xf32>, vector<2x128xf32> -> vector<2x128xf32>
    %cst_20 = arith.constant dense<0.000000e+00> : vector<2x128xf32>
    %56 = tpu.matmul %54, %3, %cst_20 {dimension_numbers = #tpu.dot_dimension_numbers<[1], [0], [0], [1], [0, 0, 1, 1], [], []>} : vector<2x32xf32>, vector<32x128xf32>, vector<2x128xf32> -> vector<2x128xf32>
    %57 = vector.extract_strided_slice %12 {offsets = [2, 0], sizes = [2, 128], strides = [1, 1]} : vector<16x128xf32> to vector<2x128xf32>
    %58 = arith.addf %57, %55 : vector<2x128xf32>
    %cst_21 = arith.constant 5.000000e-01 : f32
    %59 = vector.broadcast %cst_21 : f32 to vector<2x128xf32>
    %60 = arith.mulf %59, %58 : vector<2x128xf32>
    %61 = math.tanh %60 : vector<2x128xf32>
    %cst_22 = arith.constant 5.000000e-01 : f32
    %62 = vector.broadcast %cst_22 : f32 to vector<2x128xf32>
    %63 = arith.mulf %62, %61 : vector<2x128xf32>
    %cst_23 = arith.constant 5.000000e-01 : f32
    %64 = vector.broadcast %cst_23 : f32 to vector<2x128xf32>
    %65 = arith.addf %63, %64 : vector<2x128xf32>
    %66 = math.tanh %58 : vector<2x128xf32>
    %67 = vector.extract_strided_slice %65 {offsets = [0, 0], sizes = [2, 32], strides = [1, 1]} : vector<2x128xf32> to vector<2x32xf32>
    %68 = vector.extract_strided_slice %65 {offsets = [0, 32], sizes = [2, 32], strides = [1, 1]} : vector<2x128xf32> to vector<2x32xf32>
    %69 = vector.extract_strided_slice %66 {offsets = [0, 64], sizes = [2, 32], strides = [1, 1]} : vector<2x128xf32> to vector<2x32xf32>
    %70 = vector.extract_strided_slice %65 {offsets = [0, 96], sizes = [2, 32], strides = [1, 1]} : vector<2x128xf32> to vector<2x32xf32>
    %71 = arith.mulf %68, %32 : vector<2x32xf32>
    %72 = arith.mulf %67, %69 : vector<2x32xf32>
    %73 = arith.addf %71, %72 : vector<2x32xf32>
    %74 = math.tanh %73 : vector<2x32xf32>
    %75 = arith.mulf %70, %74 : vector<2x32xf32>
    %cst_24 = arith.constant dense<0.000000e+00> : vector<2x128xf32>
    %76 = tpu.matmul %75, %2, %cst_24 {dimension_numbers = #tpu.dot_dimension_numbers<[1], [0], [0], [1], [0, 0, 1, 1], [], []>} : vector<2x32xf32>, vector<32x128xf32>, vector<2x128xf32> -> vector<2x128xf32>
    %77 = arith.addf %76, %56 : vector<2x128xf32>
    %78 = arith.addf %77, %6 : vector<2x128xf32>
    %cst_25 = arith.constant 5.000000e-01 : f32
    %79 = vector.broadcast %cst_25 : f32 to vector<2x128xf32>
    %80 = arith.mulf %79, %78 : vector<2x128xf32>
    %81 = math.tanh %80 : vector<2x128xf32>
    %cst_26 = arith.constant 5.000000e-01 : f32
    %82 = vector.broadcast %cst_26 : f32 to vector<2x128xf32>
    %83 = arith.mulf %82, %81 : vector<2x128xf32>
    %cst_27 = arith.constant 5.000000e-01 : f32
    %84 = vector.broadcast %cst_27 : f32 to vector<2x128xf32>
    %85 = arith.addf %83, %84 : vector<2x128xf32>
    %86 = math.tanh %78 : vector<2x128xf32>
    %87 = vector.extract_strided_slice %85 {offsets = [0, 0], sizes = [2, 32], strides = [1, 1]} : vector<2x128xf32> to vector<2x32xf32>
    %88 = vector.extract_strided_slice %85 {offsets = [0, 32], sizes = [2, 32], strides = [1, 1]} : vector<2x128xf32> to vector<2x32xf32>
    %89 = vector.extract_strided_slice %86 {offsets = [0, 64], sizes = [2, 32], strides = [1, 1]} : vector<2x128xf32> to vector<2x32xf32>
    %90 = vector.extract_strided_slice %85 {offsets = [0, 96], sizes = [2, 32], strides = [1, 1]} : vector<2x128xf32> to vector<2x32xf32>
    %91 = arith.mulf %88, %52 : vector<2x32xf32>
    %92 = arith.mulf %87, %89 : vector<2x32xf32>
    %93 = arith.addf %91, %92 : vector<2x32xf32>
    %94 = math.tanh %93 : vector<2x32xf32>
    %95 = arith.mulf %90, %94 : vector<2x32xf32>
    %cst_28 = arith.constant dense<0.000000e+00> : vector<2x128xf32>
    %96 = tpu.matmul %75, %1, %cst_28 {dimension_numbers = #tpu.dot_dimension_numbers<[1], [0], [0], [1], [0, 0, 1, 1], [], []>} : vector<2x32xf32>, vector<32x128xf32>, vector<2x128xf32> -> vector<2x128xf32>
    %cst_29 = arith.constant dense<0.000000e+00> : vector<2x128xf32>
    %97 = tpu.matmul %95, %3, %cst_29 {dimension_numbers = #tpu.dot_dimension_numbers<[1], [0], [0], [1], [0, 0, 1, 1], [], []>} : vector<2x32xf32>, vector<32x128xf32>, vector<2x128xf32> -> vector<2x128xf32>
    %98 = vector.extract_strided_slice %12 {offsets = [4, 0], sizes = [2, 128], strides = [1, 1]} : vector<16x128xf32> to vector<2x128xf32>
    %99 = arith.addf %98, %96 : vector<2x128xf32>
    %cst_30 = arith.constant 5.000000e-01 : f32
    %100 = vector.broadcast %cst_30 : f32 to vector<2x128xf32>
    %101 = arith.mulf %100, %99 : vector<2x128xf32>
    %102 = math.tanh %101 : vector<2x128xf32>
    %cst_31 = arith.constant 5.000000e-01 : f32
    %103 = vector.broadcast %cst_31 : f32 to vector<2x128xf32>
    %104 = arith.mulf %103, %102 : vector<2x128xf32>
    %cst_32 = arith.constant 5.000000e-01 : f32
    %105 = vector.broadcast %cst_32 : f32 to vector<2x128xf32>
    %106 = arith.addf %104, %105 : vector<2x128xf32>
    %107 = math.tanh %99 : vector<2x128xf32>
    %108 = vector.extract_strided_slice %106 {offsets = [0, 0], sizes = [2, 32], strides = [1, 1]} : vector<2x128xf32> to vector<2x32xf32>
    %109 = vector.extract_strided_slice %106 {offsets = [0, 32], sizes = [2, 32], strides = [1, 1]} : vector<2x128xf32> to vector<2x32xf32>
    %110 = vector.extract_strided_slice %107 {offsets = [0, 64], sizes = [2, 32], strides = [1, 1]} : vector<2x128xf32> to vector<2x32xf32>
    %111 = vector.extract_strided_slice %106 {offsets = [0, 96], sizes = [2, 32], strides = [1, 1]} : vector<2x128xf32> to vector<2x32xf32>
    %112 = arith.mulf %109, %73 : vector<2x32xf32>
    %113 = arith.mulf %108, %110 : vector<2x32xf32>
    %114 = arith.addf %112, %113 : vector<2x32xf32>
    %115 = math.tanh %114 : vector<2x32xf32>
    %116 = arith.mulf %111, %115 : vector<2x32xf32>
    %cst_33 = arith.constant dense<0.000000e+00> : vector<2x128xf32>
    %117 = tpu.matmul %116, %2, %cst_33 {dimension_numbers = #tpu.dot_dimension_numbers<[1], [0], [0], [1], [0, 0, 1, 1], [], []>} : vector<2x32xf32>, vector<32x128xf32>, vector<2x128xf32> -> vector<2x128xf32>
    %118 = arith.addf %117, %97 : vector<2x128xf32>
    %119 = arith.addf %118, %6 : vector<2x128xf32>
    %cst_34 = arith.constant 5.000000e-01 : f32
    %120 = vector.broadcast %cst_34 : f32 to vector<2x128xf32>
    %121 = arith.mulf %120, %119 : vector<2x128xf32>
    %122 = math.tanh %121 : vector<2x128xf32>
    %cst_35 = arith.constant 5.000000e-01 : f32
    %123 = vector.broadcast %cst_35 : f32 to vector<2x128xf32>
    %124 = arith.mulf %123, %122 : vector<2x128xf32>
    %cst_36 = arith.constant 5.000000e-01 : f32
    %125 = vector.broadcast %cst_36 : f32 to vector<2x128xf32>
    %126 = arith.addf %124, %125 : vector<2x128xf32>
    %127 = math.tanh %119 : vector<2x128xf32>
    %128 = vector.extract_strided_slice %126 {offsets = [0, 0], sizes = [2, 32], strides = [1, 1]} : vector<2x128xf32> to vector<2x32xf32>
    %129 = vector.extract_strided_slice %126 {offsets = [0, 32], sizes = [2, 32], strides = [1, 1]} : vector<2x128xf32> to vector<2x32xf32>
    %130 = vector.extract_strided_slice %127 {offsets = [0, 64], sizes = [2, 32], strides = [1, 1]} : vector<2x128xf32> to vector<2x32xf32>
    %131 = vector.extract_strided_slice %126 {offsets = [0, 96], sizes = [2, 32], strides = [1, 1]} : vector<2x128xf32> to vector<2x32xf32>
    %132 = arith.mulf %129, %93 : vector<2x32xf32>
    %133 = arith.mulf %128, %130 : vector<2x32xf32>
    %134 = arith.addf %132, %133 : vector<2x32xf32>
    %135 = math.tanh %134 : vector<2x32xf32>
    %136 = arith.mulf %131, %135 : vector<2x32xf32>
    %cst_37 = arith.constant dense<0.000000e+00> : vector<2x128xf32>
    %137 = tpu.matmul %116, %1, %cst_37 {dimension_numbers = #tpu.dot_dimension_numbers<[1], [0], [0], [1], [0, 0, 1, 1], [], []>} : vector<2x32xf32>, vector<32x128xf32>, vector<2x128xf32> -> vector<2x128xf32>
    %cst_38 = arith.constant dense<0.000000e+00> : vector<2x128xf32>
    %138 = tpu.matmul %136, %3, %cst_38 {dimension_numbers = #tpu.dot_dimension_numbers<[1], [0], [0], [1], [0, 0, 1, 1], [], []>} : vector<2x32xf32>, vector<32x128xf32>, vector<2x128xf32> -> vector<2x128xf32>
    %139 = vector.extract_strided_slice %12 {offsets = [6, 0], sizes = [2, 128], strides = [1, 1]} : vector<16x128xf32> to vector<2x128xf32>
    %140 = arith.addf %139, %137 : vector<2x128xf32>
    %cst_39 = arith.constant 5.000000e-01 : f32
    %141 = vector.broadcast %cst_39 : f32 to vector<2x128xf32>
    %142 = arith.mulf %141, %140 : vector<2x128xf32>
    %143 = math.tanh %142 : vector<2x128xf32>
    %cst_40 = arith.constant 5.000000e-01 : f32
    %144 = vector.broadcast %cst_40 : f32 to vector<2x128xf32>
    %145 = arith.mulf %144, %143 : vector<2x128xf32>
    %cst_41 = arith.constant 5.000000e-01 : f32
    %146 = vector.broadcast %cst_41 : f32 to vector<2x128xf32>
    %147 = arith.addf %145, %146 : vector<2x128xf32>
    %148 = math.tanh %140 : vector<2x128xf32>
    %149 = vector.extract_strided_slice %147 {offsets = [0, 0], sizes = [2, 32], strides = [1, 1]} : vector<2x128xf32> to vector<2x32xf32>
    %150 = vector.extract_strided_slice %147 {offsets = [0, 32], sizes = [2, 32], strides = [1, 1]} : vector<2x128xf32> to vector<2x32xf32>
    %151 = vector.extract_strided_slice %148 {offsets = [0, 64], sizes = [2, 32], strides = [1, 1]} : vector<2x128xf32> to vector<2x32xf32>
    %152 = vector.extract_strided_slice %147 {offsets = [0, 96], sizes = [2, 32], strides = [1, 1]} : vector<2x128xf32> to vector<2x32xf32>
    %153 = arith.mulf %150, %114 : vector<2x32xf32>
    %154 = arith.mulf %149, %151 : vector<2x32xf32>
    %155 = arith.addf %153, %154 : vector<2x32xf32>
    %156 = math.tanh %155 : vector<2x32xf32>
    %157 = arith.mulf %152, %156 : vector<2x32xf32>
    %cst_42 = arith.constant dense<0.000000e+00> : vector<2x128xf32>
    %158 = tpu.matmul %157, %2, %cst_42 {dimension_numbers = #tpu.dot_dimension_numbers<[1], [0], [0], [1], [0, 0, 1, 1], [], []>} : vector<2x32xf32>, vector<32x128xf32>, vector<2x128xf32> -> vector<2x128xf32>
    %159 = arith.addf %158, %138 : vector<2x128xf32>
    %160 = arith.addf %159, %6 : vector<2x128xf32>
    %cst_43 = arith.constant 5.000000e-01 : f32
    %161 = vector.broadcast %cst_43 : f32 to vector<2x128xf32>
    %162 = arith.mulf %161, %160 : vector<2x128xf32>
    %163 = math.tanh %162 : vector<2x128xf32>
    %cst_44 = arith.constant 5.000000e-01 : f32
    %164 = vector.broadcast %cst_44 : f32 to vector<2x128xf32>
    %165 = arith.mulf %164, %163 : vector<2x128xf32>
    %cst_45 = arith.constant 5.000000e-01 : f32
    %166 = vector.broadcast %cst_45 : f32 to vector<2x128xf32>
    %167 = arith.addf %165, %166 : vector<2x128xf32>
    %168 = math.tanh %160 : vector<2x128xf32>
    %169 = vector.extract_strided_slice %167 {offsets = [0, 0], sizes = [2, 32], strides = [1, 1]} : vector<2x128xf32> to vector<2x32xf32>
    %170 = vector.extract_strided_slice %167 {offsets = [0, 32], sizes = [2, 32], strides = [1, 1]} : vector<2x128xf32> to vector<2x32xf32>
    %171 = vector.extract_strided_slice %168 {offsets = [0, 64], sizes = [2, 32], strides = [1, 1]} : vector<2x128xf32> to vector<2x32xf32>
    %172 = vector.extract_strided_slice %167 {offsets = [0, 96], sizes = [2, 32], strides = [1, 1]} : vector<2x128xf32> to vector<2x32xf32>
    %173 = arith.mulf %170, %134 : vector<2x32xf32>
    %174 = arith.mulf %169, %171 : vector<2x32xf32>
    %175 = arith.addf %173, %174 : vector<2x32xf32>
    %176 = math.tanh %175 : vector<2x32xf32>
    %177 = arith.mulf %172, %176 : vector<2x32xf32>
    %cst_46 = arith.constant dense<0.000000e+00> : vector<2x128xf32>
    %178 = tpu.matmul %157, %1, %cst_46 {dimension_numbers = #tpu.dot_dimension_numbers<[1], [0], [0], [1], [0, 0, 1, 1], [], []>} : vector<2x32xf32>, vector<32x128xf32>, vector<2x128xf32> -> vector<2x128xf32>
    %cst_47 = arith.constant dense<0.000000e+00> : vector<2x128xf32>
    %179 = tpu.matmul %177, %3, %cst_47 {dimension_numbers = #tpu.dot_dimension_numbers<[1], [0], [0], [1], [0, 0, 1, 1], [], []>} : vector<2x32xf32>, vector<32x128xf32>, vector<2x128xf32> -> vector<2x128xf32>
    %180 = vector.extract_strided_slice %12 {offsets = [8, 0], sizes = [2, 128], strides = [1, 1]} : vector<16x128xf32> to vector<2x128xf32>
    %181 = arith.addf %180, %178 : vector<2x128xf32>
    %cst_48 = arith.constant 5.000000e-01 : f32
    %182 = vector.broadcast %cst_48 : f32 to vector<2x128xf32>
    %183 = arith.mulf %182, %181 : vector<2x128xf32>
    %184 = math.tanh %183 : vector<2x128xf32>
    %cst_49 = arith.constant 5.000000e-01 : f32
    %185 = vector.broadcast %cst_49 : f32 to vector<2x128xf32>
    %186 = arith.mulf %185, %184 : vector<2x128xf32>
    %cst_50 = arith.constant 5.000000e-01 : f32
    %187 = vector.broadcast %cst_50 : f32 to vector<2x128xf32>
    %188 = arith.addf %186, %187 : vector<2x128xf32>
    %189 = math.tanh %181 : vector<2x128xf32>
    %190 = vector.extract_strided_slice %188 {offsets = [0, 0], sizes = [2, 32], strides = [1, 1]} : vector<2x128xf32> to vector<2x32xf32>
    %191 = vector.extract_strided_slice %188 {offsets = [0, 32], sizes = [2, 32], strides = [1, 1]} : vector<2x128xf32> to vector<2x32xf32>
    %192 = vector.extract_strided_slice %189 {offsets = [0, 64], sizes = [2, 32], strides = [1, 1]} : vector<2x128xf32> to vector<2x32xf32>
    %193 = vector.extract_strided_slice %188 {offsets = [0, 96], sizes = [2, 32], strides = [1, 1]} : vector<2x128xf32> to vector<2x32xf32>
    %194 = arith.mulf %191, %155 : vector<2x32xf32>
    %195 = arith.mulf %190, %192 : vector<2x32xf32>
    %196 = arith.addf %194, %195 : vector<2x32xf32>
    %197 = math.tanh %196 : vector<2x32xf32>
    %198 = arith.mulf %193, %197 : vector<2x32xf32>
    %cst_51 = arith.constant dense<0.000000e+00> : vector<2x128xf32>
    %199 = tpu.matmul %198, %2, %cst_51 {dimension_numbers = #tpu.dot_dimension_numbers<[1], [0], [0], [1], [0, 0, 1, 1], [], []>} : vector<2x32xf32>, vector<32x128xf32>, vector<2x128xf32> -> vector<2x128xf32>
    %200 = arith.addf %199, %179 : vector<2x128xf32>
    %201 = arith.addf %200, %6 : vector<2x128xf32>
    %cst_52 = arith.constant 5.000000e-01 : f32
    %202 = vector.broadcast %cst_52 : f32 to vector<2x128xf32>
    %203 = arith.mulf %202, %201 : vector<2x128xf32>
    %204 = math.tanh %203 : vector<2x128xf32>
    %cst_53 = arith.constant 5.000000e-01 : f32
    %205 = vector.broadcast %cst_53 : f32 to vector<2x128xf32>
    %206 = arith.mulf %205, %204 : vector<2x128xf32>
    %cst_54 = arith.constant 5.000000e-01 : f32
    %207 = vector.broadcast %cst_54 : f32 to vector<2x128xf32>
    %208 = arith.addf %206, %207 : vector<2x128xf32>
    %209 = math.tanh %201 : vector<2x128xf32>
    %210 = vector.extract_strided_slice %208 {offsets = [0, 0], sizes = [2, 32], strides = [1, 1]} : vector<2x128xf32> to vector<2x32xf32>
    %211 = vector.extract_strided_slice %208 {offsets = [0, 32], sizes = [2, 32], strides = [1, 1]} : vector<2x128xf32> to vector<2x32xf32>
    %212 = vector.extract_strided_slice %209 {offsets = [0, 64], sizes = [2, 32], strides = [1, 1]} : vector<2x128xf32> to vector<2x32xf32>
    %213 = vector.extract_strided_slice %208 {offsets = [0, 96], sizes = [2, 32], strides = [1, 1]} : vector<2x128xf32> to vector<2x32xf32>
    %214 = arith.mulf %211, %175 : vector<2x32xf32>
    %215 = arith.mulf %210, %212 : vector<2x32xf32>
    %216 = arith.addf %214, %215 : vector<2x32xf32>
    %217 = math.tanh %216 : vector<2x32xf32>
    %218 = arith.mulf %213, %217 : vector<2x32xf32>
    %cst_55 = arith.constant dense<0.000000e+00> : vector<2x128xf32>
    %219 = tpu.matmul %198, %1, %cst_55 {dimension_numbers = #tpu.dot_dimension_numbers<[1], [0], [0], [1], [0, 0, 1, 1], [], []>} : vector<2x32xf32>, vector<32x128xf32>, vector<2x128xf32> -> vector<2x128xf32>
    %cst_56 = arith.constant dense<0.000000e+00> : vector<2x128xf32>
    %220 = tpu.matmul %218, %3, %cst_56 {dimension_numbers = #tpu.dot_dimension_numbers<[1], [0], [0], [1], [0, 0, 1, 1], [], []>} : vector<2x32xf32>, vector<32x128xf32>, vector<2x128xf32> -> vector<2x128xf32>
    %221 = vector.extract_strided_slice %12 {offsets = [10, 0], sizes = [2, 128], strides = [1, 1]} : vector<16x128xf32> to vector<2x128xf32>
    %222 = arith.addf %221, %219 : vector<2x128xf32>
    %cst_57 = arith.constant 5.000000e-01 : f32
    %223 = vector.broadcast %cst_57 : f32 to vector<2x128xf32>
    %224 = arith.mulf %223, %222 : vector<2x128xf32>
    %225 = math.tanh %224 : vector<2x128xf32>
    %cst_58 = arith.constant 5.000000e-01 : f32
    %226 = vector.broadcast %cst_58 : f32 to vector<2x128xf32>
    %227 = arith.mulf %226, %225 : vector<2x128xf32>
    %cst_59 = arith.constant 5.000000e-01 : f32
    %228 = vector.broadcast %cst_59 : f32 to vector<2x128xf32>
    %229 = arith.addf %227, %228 : vector<2x128xf32>
    %230 = math.tanh %222 : vector<2x128xf32>
    %231 = vector.extract_strided_slice %229 {offsets = [0, 0], sizes = [2, 32], strides = [1, 1]} : vector<2x128xf32> to vector<2x32xf32>
    %232 = vector.extract_strided_slice %229 {offsets = [0, 32], sizes = [2, 32], strides = [1, 1]} : vector<2x128xf32> to vector<2x32xf32>
    %233 = vector.extract_strided_slice %230 {offsets = [0, 64], sizes = [2, 32], strides = [1, 1]} : vector<2x128xf32> to vector<2x32xf32>
    %234 = vector.extract_strided_slice %229 {offsets = [0, 96], sizes = [2, 32], strides = [1, 1]} : vector<2x128xf32> to vector<2x32xf32>
    %235 = arith.mulf %232, %196 : vector<2x32xf32>
    %236 = arith.mulf %231, %233 : vector<2x32xf32>
    %237 = arith.addf %235, %236 : vector<2x32xf32>
    %238 = math.tanh %237 : vector<2x32xf32>
    %239 = arith.mulf %234, %238 : vector<2x32xf32>
    %cst_60 = arith.constant dense<0.000000e+00> : vector<2x128xf32>
    %240 = tpu.matmul %239, %2, %cst_60 {dimension_numbers = #tpu.dot_dimension_numbers<[1], [0], [0], [1], [0, 0, 1, 1], [], []>} : vector<2x32xf32>, vector<32x128xf32>, vector<2x128xf32> -> vector<2x128xf32>
    %241 = arith.addf %240, %220 : vector<2x128xf32>
    %242 = arith.addf %241, %6 : vector<2x128xf32>
    %cst_61 = arith.constant 5.000000e-01 : f32
    %243 = vector.broadcast %cst_61 : f32 to vector<2x128xf32>
    %244 = arith.mulf %243, %242 : vector<2x128xf32>
    %245 = math.tanh %244 : vector<2x128xf32>
    %cst_62 = arith.constant 5.000000e-01 : f32
    %246 = vector.broadcast %cst_62 : f32 to vector<2x128xf32>
    %247 = arith.mulf %246, %245 : vector<2x128xf32>
    %cst_63 = arith.constant 5.000000e-01 : f32
    %248 = vector.broadcast %cst_63 : f32 to vector<2x128xf32>
    %249 = arith.addf %247, %248 : vector<2x128xf32>
    %250 = math.tanh %242 : vector<2x128xf32>
    %251 = vector.extract_strided_slice %249 {offsets = [0, 0], sizes = [2, 32], strides = [1, 1]} : vector<2x128xf32> to vector<2x32xf32>
    %252 = vector.extract_strided_slice %249 {offsets = [0, 32], sizes = [2, 32], strides = [1, 1]} : vector<2x128xf32> to vector<2x32xf32>
    %253 = vector.extract_strided_slice %250 {offsets = [0, 64], sizes = [2, 32], strides = [1, 1]} : vector<2x128xf32> to vector<2x32xf32>
    %254 = vector.extract_strided_slice %249 {offsets = [0, 96], sizes = [2, 32], strides = [1, 1]} : vector<2x128xf32> to vector<2x32xf32>
    %255 = arith.mulf %252, %216 : vector<2x32xf32>
    %256 = arith.mulf %251, %253 : vector<2x32xf32>
    %257 = arith.addf %255, %256 : vector<2x32xf32>
    %258 = math.tanh %257 : vector<2x32xf32>
    %259 = arith.mulf %254, %258 : vector<2x32xf32>
    %cst_64 = arith.constant dense<0.000000e+00> : vector<2x128xf32>
    %260 = tpu.matmul %239, %1, %cst_64 {dimension_numbers = #tpu.dot_dimension_numbers<[1], [0], [0], [1], [0, 0, 1, 1], [], []>} : vector<2x32xf32>, vector<32x128xf32>, vector<2x128xf32> -> vector<2x128xf32>
    %cst_65 = arith.constant dense<0.000000e+00> : vector<2x128xf32>
    %261 = tpu.matmul %259, %3, %cst_65 {dimension_numbers = #tpu.dot_dimension_numbers<[1], [0], [0], [1], [0, 0, 1, 1], [], []>} : vector<2x32xf32>, vector<32x128xf32>, vector<2x128xf32> -> vector<2x128xf32>
    %262 = vector.extract_strided_slice %12 {offsets = [12, 0], sizes = [2, 128], strides = [1, 1]} : vector<16x128xf32> to vector<2x128xf32>
    %263 = arith.addf %262, %260 : vector<2x128xf32>
    %cst_66 = arith.constant 5.000000e-01 : f32
    %264 = vector.broadcast %cst_66 : f32 to vector<2x128xf32>
    %265 = arith.mulf %264, %263 : vector<2x128xf32>
    %266 = math.tanh %265 : vector<2x128xf32>
    %cst_67 = arith.constant 5.000000e-01 : f32
    %267 = vector.broadcast %cst_67 : f32 to vector<2x128xf32>
    %268 = arith.mulf %267, %266 : vector<2x128xf32>
    %cst_68 = arith.constant 5.000000e-01 : f32
    %269 = vector.broadcast %cst_68 : f32 to vector<2x128xf32>
    %270 = arith.addf %268, %269 : vector<2x128xf32>
    %271 = math.tanh %263 : vector<2x128xf32>
    %272 = vector.extract_strided_slice %270 {offsets = [0, 0], sizes = [2, 32], strides = [1, 1]} : vector<2x128xf32> to vector<2x32xf32>
    %273 = vector.extract_strided_slice %270 {offsets = [0, 32], sizes = [2, 32], strides = [1, 1]} : vector<2x128xf32> to vector<2x32xf32>
    %274 = vector.extract_strided_slice %271 {offsets = [0, 64], sizes = [2, 32], strides = [1, 1]} : vector<2x128xf32> to vector<2x32xf32>
    %275 = vector.extract_strided_slice %270 {offsets = [0, 96], sizes = [2, 32], strides = [1, 1]} : vector<2x128xf32> to vector<2x32xf32>
    %276 = arith.mulf %273, %237 : vector<2x32xf32>
    %277 = arith.mulf %272, %274 : vector<2x32xf32>
    %278 = arith.addf %276, %277 : vector<2x32xf32>
    %279 = math.tanh %278 : vector<2x32xf32>
    %280 = arith.mulf %275, %279 : vector<2x32xf32>
    %cst_69 = arith.constant dense<0.000000e+00> : vector<2x128xf32>
    %281 = tpu.matmul %280, %2, %cst_69 {dimension_numbers = #tpu.dot_dimension_numbers<[1], [0], [0], [1], [0, 0, 1, 1], [], []>} : vector<2x32xf32>, vector<32x128xf32>, vector<2x128xf32> -> vector<2x128xf32>
    %282 = arith.addf %281, %261 : vector<2x128xf32>
    %283 = arith.addf %282, %6 : vector<2x128xf32>
    %cst_70 = arith.constant 5.000000e-01 : f32
    %284 = vector.broadcast %cst_70 : f32 to vector<2x128xf32>
    %285 = arith.mulf %284, %283 : vector<2x128xf32>
    %286 = math.tanh %285 : vector<2x128xf32>
    %cst_71 = arith.constant 5.000000e-01 : f32
    %287 = vector.broadcast %cst_71 : f32 to vector<2x128xf32>
    %288 = arith.mulf %287, %286 : vector<2x128xf32>
    %cst_72 = arith.constant 5.000000e-01 : f32
    %289 = vector.broadcast %cst_72 : f32 to vector<2x128xf32>
    %290 = arith.addf %288, %289 : vector<2x128xf32>
    %291 = math.tanh %283 : vector<2x128xf32>
    %292 = vector.extract_strided_slice %290 {offsets = [0, 0], sizes = [2, 32], strides = [1, 1]} : vector<2x128xf32> to vector<2x32xf32>
    %293 = vector.extract_strided_slice %290 {offsets = [0, 32], sizes = [2, 32], strides = [1, 1]} : vector<2x128xf32> to vector<2x32xf32>
    %294 = vector.extract_strided_slice %291 {offsets = [0, 64], sizes = [2, 32], strides = [1, 1]} : vector<2x128xf32> to vector<2x32xf32>
    %295 = vector.extract_strided_slice %290 {offsets = [0, 96], sizes = [2, 32], strides = [1, 1]} : vector<2x128xf32> to vector<2x32xf32>
    %296 = arith.mulf %293, %257 : vector<2x32xf32>
    %297 = arith.mulf %292, %294 : vector<2x32xf32>
    %298 = arith.addf %296, %297 : vector<2x32xf32>
    %299 = math.tanh %298 : vector<2x32xf32>
    %300 = arith.mulf %295, %299 : vector<2x32xf32>
    %cst_73 = arith.constant dense<0.000000e+00> : vector<2x128xf32>
    %301 = tpu.matmul %280, %1, %cst_73 {dimension_numbers = #tpu.dot_dimension_numbers<[1], [0], [0], [1], [0, 0, 1, 1], [], []>} : vector<2x32xf32>, vector<32x128xf32>, vector<2x128xf32> -> vector<2x128xf32>
    %cst_74 = arith.constant dense<0.000000e+00> : vector<2x128xf32>
    %302 = tpu.matmul %300, %3, %cst_74 {dimension_numbers = #tpu.dot_dimension_numbers<[1], [0], [0], [1], [0, 0, 1, 1], [], []>} : vector<2x32xf32>, vector<32x128xf32>, vector<2x128xf32> -> vector<2x128xf32>
    %303 = vector.extract_strided_slice %12 {offsets = [14, 0], sizes = [2, 128], strides = [1, 1]} : vector<16x128xf32> to vector<2x128xf32>
    %304 = arith.addf %303, %301 : vector<2x128xf32>
    %cst_75 = arith.constant 5.000000e-01 : f32
    %305 = vector.broadcast %cst_75 : f32 to vector<2x128xf32>
    %306 = arith.mulf %305, %304 : vector<2x128xf32>
    %307 = math.tanh %306 : vector<2x128xf32>
    %cst_76 = arith.constant 5.000000e-01 : f32
    %308 = vector.broadcast %cst_76 : f32 to vector<2x128xf32>
    %309 = arith.mulf %308, %307 : vector<2x128xf32>
    %cst_77 = arith.constant 5.000000e-01 : f32
    %310 = vector.broadcast %cst_77 : f32 to vector<2x128xf32>
    %311 = arith.addf %309, %310 : vector<2x128xf32>
    %312 = math.tanh %304 : vector<2x128xf32>
    %313 = vector.extract_strided_slice %311 {offsets = [0, 0], sizes = [2, 32], strides = [1, 1]} : vector<2x128xf32> to vector<2x32xf32>
    %314 = vector.extract_strided_slice %311 {offsets = [0, 32], sizes = [2, 32], strides = [1, 1]} : vector<2x128xf32> to vector<2x32xf32>
    %315 = vector.extract_strided_slice %312 {offsets = [0, 64], sizes = [2, 32], strides = [1, 1]} : vector<2x128xf32> to vector<2x32xf32>
    %316 = vector.extract_strided_slice %311 {offsets = [0, 96], sizes = [2, 32], strides = [1, 1]} : vector<2x128xf32> to vector<2x32xf32>
    %317 = arith.mulf %314, %278 : vector<2x32xf32>
    %318 = arith.mulf %313, %315 : vector<2x32xf32>
    %319 = arith.addf %317, %318 : vector<2x32xf32>
    %320 = math.tanh %319 : vector<2x32xf32>
    %321 = arith.mulf %316, %320 : vector<2x32xf32>
    %cst_78 = arith.constant dense<0.000000e+00> : vector<2x128xf32>
    %322 = tpu.matmul %321, %2, %cst_78 {dimension_numbers = #tpu.dot_dimension_numbers<[1], [0], [0], [1], [0, 0, 1, 1], [], []>} : vector<2x32xf32>, vector<32x128xf32>, vector<2x128xf32> -> vector<2x128xf32>
    %323 = arith.addf %322, %302 : vector<2x128xf32>
    %324 = arith.addf %323, %6 : vector<2x128xf32>
    %cst_79 = arith.constant 5.000000e-01 : f32
    %325 = vector.broadcast %cst_79 : f32 to vector<2x128xf32>
    %326 = arith.mulf %325, %324 : vector<2x128xf32>
    %327 = math.tanh %326 : vector<2x128xf32>
    %cst_80 = arith.constant 5.000000e-01 : f32
    %328 = vector.broadcast %cst_80 : f32 to vector<2x128xf32>
    %329 = arith.mulf %328, %327 : vector<2x128xf32>
    %cst_81 = arith.constant 5.000000e-01 : f32
    %330 = vector.broadcast %cst_81 : f32 to vector<2x128xf32>
    %331 = arith.addf %329, %330 : vector<2x128xf32>
    %332 = math.tanh %324 : vector<2x128xf32>
    %333 = vector.extract_strided_slice %331 {offsets = [0, 0], sizes = [2, 32], strides = [1, 1]} : vector<2x128xf32> to vector<2x32xf32>
    %334 = vector.extract_strided_slice %331 {offsets = [0, 32], sizes = [2, 32], strides = [1, 1]} : vector<2x128xf32> to vector<2x32xf32>
    %335 = vector.extract_strided_slice %332 {offsets = [0, 64], sizes = [2, 32], strides = [1, 1]} : vector<2x128xf32> to vector<2x32xf32>
    %336 = vector.extract_strided_slice %331 {offsets = [0, 96], sizes = [2, 32], strides = [1, 1]} : vector<2x128xf32> to vector<2x32xf32>
    %337 = arith.mulf %334, %298 : vector<2x32xf32>
    %338 = arith.mulf %333, %335 : vector<2x32xf32>
    %339 = arith.addf %337, %338 : vector<2x32xf32>
    %340 = math.tanh %339 : vector<2x32xf32>
    %341 = arith.mulf %336, %340 : vector<2x32xf32>
    %c3 = arith.constant 3 : index
    %c0_82 = arith.constant 0 : index
    %342 = vector.load %arg2[%c3, %c0_82] : memref<8x128xf32, #tpu.memory_space<vmem>>, vector<1x1xf32>
    %c2 = arith.constant 2 : index
    %c0_83 = arith.constant 0 : index
    %343 = vector.load %arg2[%c2, %c0_83] : memref<8x128xf32, #tpu.memory_space<vmem>>, vector<1x32xf32>
    %344 = vector.broadcast %343 : vector<1x32xf32> to vector<2x32xf32>
    %345 = arith.mulf %341, %344 : vector<2x32xf32>
    %cst_84 = arith.constant dense<0.000000e+00> : vector<2xf32>
    %346 = vector.multi_reduction <add>, %345, %cst_84 [1] : vector<2x32xf32> to vector<2xf32>
    %347 = vector.shape_cast %346 : vector<2xf32> to vector<2x1xf32>
    %348 = vector.broadcast %342 : vector<1x1xf32> to vector<2x1xf32>
    %349 = arith.addf %347, %348 : vector<2x1xf32>
    %c0_85 = arith.constant 0 : index
    %c0_86 = arith.constant 0 : index
    %350 = vector.load %arg3[%c0_85, %c0_86] : memref<2x1xf32, #tpu.memory_space<vmem>>, vector<2x1xf32>
    tpu.vector_store %arg3[%c0_85, %c0_86], %349 {strides = array<i32>} : memref<2x1xf32, #tpu.memory_space<vmem>>, vector<2x1xf32>,
    return
  }
}

</mosaic_0001>

<llo_original>
// kernel: tpu_custom_call.1
$region0: #{tpu_custom_call.1}
  #allocation0 [shape = 'u32[]', space=smem, size = 0x4, offset = 0x4, fixed_abs, tag = 'smem constant byte address 0x4 - core index']
  #allocation1 [shape = 'u32[144,128]{1,0:T(1,128)}', space=vmem, size = 0x12000, scoped, tag = 'internal scratch']
  %s0 = inlined_call_operand.hbm [shape: f32[16,16], index: 0, kind: input, shape index: {}]
  %s1 = inlined_call_operand.hbm [shape: f32[112,128], index: 1, kind: input, shape index: {}]
  %s2 = inlined_call_operand.hbm [shape: f32[8,128], index: 2, kind: input, shape index: {}]
  %s3 = inlined_call_operand.vmem [shape: f32[2,1], index: 3, kind: output, shape index: {}]
  %s4 = sld [smem:[#allocation0]]
  $region34: #{tpu_custom_call.1} parent=0
    _
  %s6 = ssub.s32 1, %s4
  %s7 = scalar_select 0, %s6, %s4
  $region1: #{tpu_custom_call.1} parent=0
    #allocation2 [shape = 'u8[8192]{0}', space=vmem, size = 0x2000, scoped, tag = 'input window, operand 0, single buffered']
    #allocation3 [shape = 's32[1]{0}', space=sflag, size = 0x4, scoped, tag = 'scoped memory for tpu_custom_call.1']
    #allocation4 [shape = 'u8[57344]{0}', space=vmem, size = 0xe000, scoped, tag = 'input window, operand 1, single buffered']
    #allocation5 [shape = 's32[1]{0}', space=sflag, size = 0x4, scoped, tag = 'scoped memory for tpu_custom_call.1']
    #allocation6 [shape = 'u8[4096]{0}', space=vmem, size = 0x1000, scoped, tag = 'input window, operand 2, single buffered']
    %8 = vsyncpa [#allocation3], 0
    %9 = vsyncpa [#allocation5], 0
    // Predicated region
    $region2: #{tpu_custom_call.1} parent=1 // pred_check
      _
    $region3: #{tpu_custom_call.1} parent=1 // pred_check_branch
      %11 = sbr.rel (0) target = $region5
    $region4: #{tpu_custom_call.1} parent=1 // pred_region
      %s13 = ssub.s32 256, 256
      %14 = vsyncadd [#allocation3], %s13
      %s15 = sshll.u32 [#allocation2], 4
      %s16 = int_to_ptr.vmem [resolvable:$true] %s15
      %21 = dma.hbm_to_vmem [thread:$0]  %s0, 256, %s16, [#allocation3], 128, 128, 8
    $region5: #{tpu_custom_call.1} parent=1 // pred_fallthru
      _
    // Predicated region
    $region6: #{tpu_custom_call.1} parent=1 // pred_check
      _
    $region7: #{tpu_custom_call.1} parent=1 // pred_check_branch
      %23 = sbr.rel (0) target = $region9
    $region8: #{tpu_custom_call.1} parent=1 // pred_region
      %s25 = ssub.s32 1792, 1792
      %26 = vsyncadd [#allocation5], %s25
      %s27 = sshll.u32 [#allocation4], 4
      %s28 = int_to_ptr.vmem [resolvable:$true] %s27
      %33 = dma.hbm_to_vmem [thread:$0]  %s1, 1792, %s28, [#allocation5], 128, 128, 8
    $region9: #{tpu_custom_call.1} parent=1 // pred_fallthru
      _
    // Predicated region
    $region10: #{tpu_custom_call.1} parent=1 // pred_check
      _
    $region11: #{tpu_custom_call.1} parent=1 // pred_check_branch
      %35 = sbr.rel (0) target = $region13
    $region12: #{tpu_custom_call.1} parent=1 // pred_region
      %s37 = ssub.s32 128, 128
      %38 = vsyncadd [#allocation5], %s37
      %s40 = sshll.u32 [#allocation6], 4
      %s41 = int_to_ptr.vmem [resolvable:$true] %s40
      %43 = dma.hbm_to_vmem [thread:$0]  %s2, 128, %s41, [#allocation5]
    $region13: #{tpu_custom_call.1} parent=1 // pred_fallthru
      _
    // Predicated region
    $region14: #{tpu_custom_call.1} parent=1 // pred_check
      _
    $region15: #{tpu_custom_call.1} parent=1 // pred_check_branch
      %45 = sbr.rel (0) target = $region17
    $region16: #{tpu_custom_call.1} parent=1 // pred_region
      %46 = dma.done [#allocation3], 256
    $region17: #{tpu_custom_call.1} parent=1 // pred_fallthru
      _
    // Predicated region
    $region18: #{tpu_custom_call.1} parent=1 // pred_check
      _
    $region19: #{tpu_custom_call.1} parent=1 // pred_check_branch
      %48 = sbr.rel (0) target = $region21
    $region20: #{tpu_custom_call.1} parent=1 // pred_region
      %49 = dma.done [#allocation5], 1792
    $region21: #{tpu_custom_call.1} parent=1 // pred_fallthru
      _
    // Predicated region
    $region22: #{tpu_custom_call.1} parent=1 // pred_check
      _
    $region23: #{tpu_custom_call.1} parent=1 // pred_check_branch
      %51 = sbr.rel (0) target = $region25
    $region24: #{tpu_custom_call.1} parent=1 // pred_region
      %52 = dma.done [#allocation5], 128
    $region25: #{tpu_custom_call.1} parent=1 // pred_fallthru
      _
    %v53 = vld [vmem:[#allocation4] sm:$0xff]
    %v54 = vld [vmem:[#allocation4 + $0x8] sm:$0xff]
    %v55 = vld [vmem:[#allocation4 + $0x10] sm:$0xff]
    %v56 = vld [vmem:[#allocation4 + $0x18] sm:$0xff]
    %v57 = vld [vmem:[#allocation4 + $0x20] sm:$0xff]
    %v58 = vld [vmem:[#allocation4 + $0x28] sm:$0xff]
    %v59 = vld [vmem:[#allocation4 + $0x30] sm:$0xff]
    %v60 = vld [vmem:[#allocation4 + $0x38] sm:$0xff]
    %v61 = vld [vmem:[#allocation4 + $0x40] sm:$0xff]
    %v62 = vld [vmem:[#allocation4 + $0x48] sm:$0xff]
    %v63 = vld [vmem:[#allocation4 + $0x50] sm:$0xff]
    %v64 = vld [vmem:[#allocation4 + $0x58] sm:$0xff]
    %v65 = vld [vmem:[#allocation4 + $0x60] sm:$0xff]
    %v66 = vld [vmem:[#allocation4 + $0x68] sm:$0xff]
    %v67 = vld [vmem:[#allocation6 + $0x1] sm:$0x1]
    %v68 = vlaneseq
    %v69 = vshrl.u32 %v68, 7
    %v70 = vsub.s32 0, %v69
    %v71 = vrot.slane %v67, %v70
    %v72 = vld [vmem:[#allocation2] sm:$0xff]
    %v73 = vld [vmem:[#allocation2 + $0x8] sm:$0xff]
    %v74 = vld [vmem:[#allocation6] sm:$0x1]
    %v75 = vlaneseq
    %v76 = vshrl.u32 %v75, 7
    %v77 = vsub.s32 0, %v76
    %v78 = vrot.slane %v74, %v77
    %vm79 = vcmask 130048
    %v81 = vsel %vm79, %v72, 0
    %v84 = vsel %vm79, %v73, 0
    %86 = vmatprep.subr.mxu0 0.0
    %87 = vmatpush1.msra.mxu0 %v53
    %88 = vmatprep.subr.mxu0 0.0
    %89 = vmatpush1.msra.mxu0 %v54
    %90 = vmatprep.subr.mxu0 0.0
    %91 = vmatpush1.msra.mxu0 0.0
    %92 = vmatprep.subr.mxu0 0.0
    %93 = vmatpush1.msra.mxu0 0.0
    %94 = vmatprep.subr.mxu0 0.0
    %95 = vmatpush1.msra.mxu0 0.0
    %96 = vmatprep.subr.mxu0 0.0
    %97 = vmatpush1.msra.mxu0 0.0
    %98 = vmatprep.subr.mxu0 0.0
    %99 = vmatpush1.msra.mxu0 0.0
    %100 = vmatprep.subr.mxu0 0.0
    %101 = vmatpush1.msra.mxu0 0.0
    %102 = vmatprep.subr.mxu0 0.0
    %103 = vmatpush1.msra.mxu0 0.0
    %104 = vmatprep.subr.mxu0 0.0
    %105 = vmatpush1.msra.mxu0 0.0
    %106 = vmatprep.subr.mxu0 0.0
    %107 = vmatpush1.msra.mxu0 0.0
    %108 = vmatprep.subr.mxu0 0.0
    %109 = vmatpush1.msra.mxu0 0.0
    %110 = vmatprep.subr.mxu0 0.0
    %111 = vmatpush1.msra.mxu0 0.0
    %112 = vmatprep.subr.mxu0 0.0
    %113 = vmatpush1.msra.mxu0 0.0
    %114 = vmatprep.subr.mxu0 0.0
    %115 = vmatpush1.msra.mxu0 0.0
    %116 = vmatprep.subr.mxu0 0.0
    %117 = vmatpush1.msra.mxu0 0.0
    %118 = vmatprep.subr.mxu0 0.0
    %119 = vmatpush1.msra.mxu0 0.0
    %120 = vmatprep.subr.mxu0 0.0
    %121 = vmatpush1.msra.mxu0 0.0
    %122 = vmatprep.subr.mxu0 0.0
    %123 = vmatpush1.msra.mxu0 0.0
    %124 = vmatprep.subr.mxu0 0.0
    %125 = vmatpush1.msra.mxu0 0.0
    %126 = vmatprep.subr.mxu0 0.0
    %127 = vmatpush1.msra.mxu0 0.0
    %128 = vmatprep.subr.mxu0 0.0
    %129 = vmatpush1.msra.mxu0 0.0
    %130 = vmatprep.subr.mxu0 0.0
    %131 = vmatpush1.msra.mxu0 0.0
    %132 = vmatprep.subr.mxu0 0.0
    %133 = vmatpush1.msra.mxu0 0.0
    %134 = vmatprep.subr.mxu0 0.0
    %135 = vmatpush1.msra.mxu0 0.0
    %136 = vmatprep.subr.mxu0 0.0
    %137 = vmatpush1.msra.mxu0 0.0
    %138 = vmatprep.subr.mxu0 0.0
    %139 = vmatpush1.msra.mxu0 0.0
    %140 = vmatprep.subr.mxu0 0.0
    %141 = vmatpush1.msra.mxu0 0.0
    %142 = vmatprep.subr.mxu0 0.0
    %143 = vmatpush1.msra.mxu0 0.0
    %144 = vmatprep.subr.mxu0 0.0
    %145 = vmatpush1.msra.mxu0 0.0
    %146 = vmatprep.subr.mxu0 0.0
    %147 = vmatpush1.msra.mxu0 0.0
    %148 = vmatprep.subr.mxu0 0.0
    %149 = vmatpush1.msra.mxu0 0.0
    %150 = vmatprep.mubr.f32.mxu0 0.0
    %151 = vmatmul.mubr.f32.gmra.mrb[0].mxu0 %v81
    %v152 = vpop.f32.mrb[0].mxu0
    %v153 = vadd.f32 %v78, %v152
    %v154 = vpop.f32.mrb[0].mxu0
    %155 = vmatprep.mubr.f32.mxu0 0.0
    %156 = vmatmul.mubr.f32.gmra.mrb[0].mxu0 %v84
    %v157 = vpop.f32.mrb[0].mxu0
    %v158 = vadd.f32 %v78, %v157
    %v159 = vpop.f32.mrb[0].mxu0
    %160 = vdwg.mxu0
    %vm161 = vcmask 261120
    %v163 = vsel %vm161, 0.0, 0
    %165 = vmatprep.subr.mxu0 0.0
    %166 = vmatpush1.msra.mxu0 %v55
    %167 = vmatprep.subr.mxu0 0.0
    %168 = vmatpush1.msra.mxu0 %v56
    %169 = vmatprep.subr.mxu0 0.0
    %170 = vmatpush1.msra.mxu0 %v57
    %171 = vmatprep.subr.mxu0 0.0
    %172 = vmatpush1.msra.mxu0 %v58
    %173 = vmatprep.subr.mxu0 0.0
    %174 = vmatpush1.msra.mxu0 0.0
    %175 = vmatprep.subr.mxu0 0.0
    %176 = vmatpush1.msra.mxu0 0.0
    %177 = vmatprep.subr.mxu0 0.0
    %178 = vmatpush1.msra.mxu0 0.0
    %179 = vmatprep.subr.mxu0 0.0
    %180 = vmatpush1.msra.mxu0 0.0
    %181 = vmatprep.subr.mxu0 0.0
    %182 = vmatpush1.msra.mxu0 0.0
    %183 = vmatprep.subr.mxu0 0.0
    %184 = vmatpush1.msra.mxu0 0.0
    %185 = vmatprep.subr.mxu0 0.0
    %186 = vmatpush1.msra.mxu0 0.0
    %187 = vmatprep.subr.mxu0 0.0
    %188 = vmatpush1.msra.mxu0 0.0
    %189 = vmatprep.subr.mxu0 0.0
    %190 = vmatpush1.msra.mxu0 0.0
    %191 = vmatprep.subr.mxu0 0.0
    %192 = vmatpush1.msra.mxu0 0.0
    %193 = vmatprep.subr.mxu0 0.0
    %194 = vmatpush1.msra.mxu0 0.0
    %195 = vmatprep.subr.mxu0 0.0
    %196 = vmatpush1.msra.mxu0 0.0
    %197 = vmatprep.subr.mxu0 0.0
    %198 = vmatpush1.msra.mxu0 0.0
    %199 = vmatprep.subr.mxu0 0.0
    %200 = vmatpush1.msra.mxu0 0.0
    %201 = vmatprep.subr.mxu0 0.0
    %202 = vmatpush1.msra.mxu0 0.0
    %203 = vmatprep.subr.mxu0 0.0
    %204 = vmatpush1.msra.mxu0 0.0
    %205 = vmatprep.subr.mxu0 0.0
    %206 = vmatpush1.msra.mxu0 0.0
    %207 = vmatprep.subr.mxu0 0.0
    %208 = vmatpush1.msra.mxu0 0.0
    %209 = vmatprep.subr.mxu0 0.0
    %210 = vmatpush1.msra.mxu0 0.0
    %211 = vmatprep.subr.mxu0 0.0
    %212 = vmatpush1.msra.mxu0 0.0
    %213 = vmatprep.subr.mxu0 0.0
    %214 = vmatpush1.msra.mxu0 0.0
    %215 = vmatprep.subr.mxu0 0.0
    %216 = vmatpush1.msra.mxu0 0.0
    %217 = vmatprep.subr.mxu0 0.0
    %218 = vmatpush1.msra.mxu0 0.0
    %219 = vmatprep.subr.mxu0 0.0
    %220 = vmatpush1.msra.mxu0 0.0
    %221 = vmatprep.subr.mxu0 0.0
    %222 = vmatpush1.msra.mxu0 0.0
    %223 = vmatprep.subr.mxu0 0.0
    %224 = vmatpush1.msra.mxu0 0.0
    %225 = vmatprep.subr.mxu0 0.0
    %226 = vmatpush1.msra.mxu0 0.0
    %227 = vmatprep.subr.mxu0 0.0
    %228 = vmatpush1.msra.mxu0 0.0
    %229 = vmatprep.mubr.f32.mxu0 0.0
    %230 = vmatmul.mubr.f32.gmra.mrb[0].mxu0 %v163
    %v231 = vpop.f32.mrb[0].mxu0
    %v232 = vadd.f32 0.0, %v231
    %v233 = vpop.f32.mrb[0].mxu0
    %234 = vdwg.mxu0
    %235 = vmatprep.subr.mxu0 0.0
    %236 = vmatpush1.msra.mxu0 %v63
    %237 = vmatprep.subr.mxu0 0.0
    %238 = vmatpush1.msra.mxu0 %v64
    %239 = vmatprep.subr.mxu0 0.0
    %240 = vmatpush1.msra.mxu0 %v65
    %241 = vmatprep.subr.mxu0 0.0
    %242 = vmatpush1.msra.mxu0 %v66
    %243 = vmatprep.subr.mxu0 0.0
    %244 = vmatpush1.msra.mxu0 0.0
    %245 = vmatprep.subr.mxu0 0.0
    %246 = vmatpush1.msra.mxu0 0.0
    %247 = vmatprep.subr.mxu0 0.0
    %248 = vmatpush1.msra.mxu0 0.0
    %249 = vmatprep.subr.mxu0 0.0
    %250 = vmatpush1.msra.mxu0 0.0
    %251 = vmatprep.subr.mxu0 0.0
    %252 = vmatpush1.msra.mxu0 0.0
    %253 = vmatprep.subr.mxu0 0.0
    %254 = vmatpush1.msra.mxu0 0.0
    %255 = vmatprep.subr.mxu0 0.0
    %256 = vmatpush1.msra.mxu0 0.0
    %257 = vmatprep.subr.mxu0 0.0
    %258 = vmatpush1.msra.mxu0 0.0
    %259 = vmatprep.subr.mxu0 0.0
    %260 = vmatpush1.msra.mxu0 0.0
    %261 = vmatprep.subr.mxu0 0.0
    %262 = vmatpush1.msra.mxu0 0.0
    %263 = vmatprep.subr.mxu0 0.0
    %264 = vmatpush1.msra.mxu0 0.0
    %265 = vmatprep.subr.mxu0 0.0
    %266 = vmatpush1.msra.mxu0 0.0
    %267 = vmatprep.subr.mxu0 0.0
    %268 = vmatpush1.msra.mxu0 0.0
    %269 = vmatprep.subr.mxu0 0.0
    %270 = vmatpush1.msra.mxu0 0.0
    %271 = vmatprep.subr.mxu0 0.0
    %272 = vmatpush1.msra.mxu0 0.0
    %273 = vmatprep.subr.mxu0 0.0
    %274 = vmatpush1.msra.mxu0 0.0
    %275 = vmatprep.subr.mxu0 0.0
    %276 = vmatpush1.msra.mxu0 0.0
    %277 = vmatprep.subr.mxu0 0.0
    %278 = vmatpush1.msra.mxu0 0.0
    %279 = vmatprep.subr.mxu0 0.0
    %280 = vmatpush1.msra.mxu0 0.0
    %281 = vmatprep.subr.mxu0 0.0
    %282 = vmatpush1.msra.mxu0 0.0
    %283 = vmatprep.subr.mxu0 0.0
    %284 = vmatpush1.msra.mxu0 0.0
    %285 = vmatprep.subr.mxu0 0.0
    %286 = vmatpush1.msra.mxu0 0.0
    %287 = vmatprep.subr.mxu0 0.0
    %288 = vmatpush1.msra.mxu0 0.0
    %289 = vmatprep.subr.mxu0 0.0
    %290 = vmatpush1.msra.mxu0 0.0
    %291 = vmatprep.subr.mxu0 0.0
    %292 = vmatpush1.msra.mxu0 0.0
    %293 = vmatprep.subr.mxu0 0.0
    %294 = vmatpush1.msra.mxu0 0.0
    %295 = vmatprep.subr.mxu0 0.0
    %296 = vmatpush1.msra.mxu0 0.0
    %297 = vmatprep.subr.mxu0 0.0
    %298 = vmatpush1.msra.mxu0 0.0
    %299 = vmatprep.mubr.f32.mxu0 0.0
    %300 = vmatmul.mubr.f32.gmra.mrb[0].mxu0 %v163
    %v301 = vpop.f32.mrb[0].mxu0
    %v302 = vadd.f32 0.0, %v301
    %v303 = vpop.f32.mrb[0].mxu0
    %304 = vdwg.mxu0
    %v305 = vadd.f32 %v153, %v232
    %v306 = vmul.f32 %v305, 0.5
    %v307 = vtanh.pop %v306
    %v308 = vmul.f32 %v307, 0.5
    %v309 = vadd.f32 %v308, 0.5
    %v310 = vtanh.pop %v305
    %v311 = vmul.f32 %v309, 0.0
    %313 = vrot.lane.b32.xlu0 %v310, 64
    %v314 = vpop.permute.xlu0 %313
    %v316 = vmul.f32 %v309, %v314
    %318 = vrot.lane.b32.xlu0 %v316, 32
    %v319 = vpop.permute.xlu0 %318
    %v321 = vadd.f32 %v311, %v319
    %v322 = vtanh.pop %v321
    %324 = vrot.lane.b32.xlu0 %v322, 64
    %v325 = vpop.permute.xlu0 %324
    %v327 = vmul.f32 %v309, %v325
    %329 = vrot.lane.b32.xlu0 %v327, 32
    %v330 = vpop.permute.xlu0 %329
    %v331 = vsel %vm161, %v330, 0
    %333 = vmatprep.subr.mxu0 0.0
    %334 = vmatpush1.msra.mxu0 %v59
    %335 = vmatprep.subr.mxu0 0.0
    %336 = vmatpush1.msra.mxu0 %v60
    %337 = vmatprep.subr.mxu0 0.0
    %338 = vmatpush1.msra.mxu0 %v61
    %339 = vmatprep.subr.mxu0 0.0
    %340 = vmatpush1.msra.mxu0 %v62
    %341 = vmatprep.subr.mxu0 0.0
    %342 = vmatpush1.msra.mxu0 0.0
    %343 = vmatprep.subr.mxu0 0.0
    %344 = vmatpush1.msra.mxu0 0.0
    %345 = vmatprep.subr.mxu0 0.0
    %346 = vmatpush1.msra.mxu0 0.0
    %347 = vmatprep.subr.mxu0 0.0
    %348 = vmatpush1.msra.mxu0 0.0
    %349 = vmatprep.subr.mxu0 0.0
    %350 = vmatpush1.msra.mxu0 0.0
    %351 = vmatprep.subr.mxu0 0.0
    %352 = vmatpush1.msra.mxu0 0.0
    %353 = vmatprep.subr.mxu0 0.0
    %354 = vmatpush1.msra.mxu0 0.0
    %355 = vmatprep.subr.mxu0 0.0
    %356 = vmatpush1.msra.mxu0 0.0
    %357 = vmatprep.subr.mxu0 0.0
    %358 = vmatpush1.msra.mxu0 0.0
    %359 = vmatprep.subr.mxu0 0.0
    %360 = vmatpush1.msra.mxu0 0.0
    %361 = vmatprep.subr.mxu0 0.0
    %362 = vmatpush1.msra.mxu0 0.0
    %363 = vmatprep.subr.mxu0 0.0
    %364 = vmatpush1.msra.mxu0 0.0
    %365 = vmatprep.subr.mxu0 0.0
    %366 = vmatpush1.msra.mxu0 0.0
    %367 = vmatprep.subr.mxu0 0.0
    %368 = vmatpush1.msra.mxu0 0.0
    %369 = vmatprep.subr.mxu0 0.0
    %370 = vmatpush1.msra.mxu0 0.0
    %371 = vmatprep.subr.mxu0 0.0
    %372 = vmatpush1.msra.mxu0 0.0
    %373 = vmatprep.subr.mxu0 0.0
    %374 = vmatpush1.msra.mxu0 0.0
    %375 = vmatprep.subr.mxu0 0.0
    %376 = vmatpush1.msra.mxu0 0.0
    %377 = vmatprep.subr.mxu0 0.0
    %378 = vmatpush1.msra.mxu0 0.0
    %379 = vmatprep.subr.mxu0 0.0
    %380 = vmatpush1.msra.mxu0 0.0
    %381 = vmatprep.subr.mxu0 0.0
    %382 = vmatpush1.msra.mxu0 0.0
    %383 = vmatprep.subr.mxu0 0.0
    %384 = vmatpush1.msra.mxu0 0.0
    %385 = vmatprep.subr.mxu0 0.0
    %386 = vmatpush1.msra.mxu0 0.0
    %387 = vmatprep.subr.mxu0 0.0
    %388 = vmatpush1.msra.mxu0 0.0
    %389 = vmatprep.subr.mxu0 0.0
    %390 = vmatpush1.msra.mxu0 0.0
    %391 = vmatprep.subr.mxu0 0.0
    %392 = vmatpush1.msra.mxu0 0.0
    %393 = vmatprep.subr.mxu0 0.0
    %394 = vmatpush1.msra.mxu0 0.0
    %395 = vmatprep.subr.mxu0 0.0
    %396 = vmatpush1.msra.mxu0 0.0
    %397 = vmatprep.mubr.f32.mxu0 0.0
    %398 = vmatmul.mubr.f32.gmra.mrb[0].mxu0 %v331
    %v399 = vpop.f32.mrb[0].mxu0
    %v400 = vadd.f32 %v302, %v399
    %v401 = vpop.f32.mrb[0].mxu0
    %402 = vdwg.mxu0
    %v403 = vadd.f32 %v400, %v71
    %v404 = vmul.f32 %v403, 0.5
    %v405 = vtanh.pop %v404
    %v406 = vmul.f32 %v405, 0.5
    %v407 = vadd.f32 %v406, 0.5
    %v408 = vtanh.pop %v403
    %v409 = vmul.f32 %v407, 0.0
    %411 = vrot.lane.b32.xlu0 %v408, 64
    %v412 = vpop.permute.xlu0 %411
    %v414 = vmul.f32 %v407, %v412
    %416 = vrot.lane.b32.xlu0 %v414, 32
    %v417 = vpop.permute.xlu0 %416
    %v419 = vadd.f32 %v409, %v417
    %v420 = vtanh.pop %v419
    %422 = vrot.lane.b32.xlu0 %v420, 64
    %v423 = vpop.permute.xlu0 %422
    %v425 = vmul.f32 %v407, %v423
    %426 = vmatprep.subr.mxu0 0.0
    %427 = vmatpush1.msra.mxu0 %v55
    %428 = vmatprep.subr.mxu0 0.0
    %429 = vmatpush1.msra.mxu0 %v56
    %430 = vmatprep.subr.mxu0 0.0
    %431 = vmatpush1.msra.mxu0 %v57
    %432 = vmatprep.subr.mxu0 0.0
    %433 = vmatpush1.msra.mxu0 %v58
    %434 = vmatprep.subr.mxu0 0.0
    %435 = vmatpush1.msra.mxu0 0.0
    %436 = vmatprep.subr.mxu0 0.0
    %437 = vmatpush1.msra.mxu0 0.0
    %438 = vmatprep.subr.mxu0 0.0
    %439 = vmatpush1.msra.mxu0 0.0
    %440 = vmatprep.subr.mxu0 0.0
    %441 = vmatpush1.msra.mxu0 0.0
    %442 = vmatprep.subr.mxu0 0.0
    %443 = vmatpush1.msra.mxu0 0.0
    %444 = vmatprep.subr.mxu0 0.0
    %445 = vmatpush1.msra.mxu0 0.0
    %446 = vmatprep.subr.mxu0 0.0
    %447 = vmatpush1.msra.mxu0 0.0
    %448 = vmatprep.subr.mxu0 0.0
    %449 = vmatpush1.msra.mxu0 0.0
    %450 = vmatprep.subr.mxu0 0.0
    %451 = vmatpush1.msra.mxu0 0.0
    %452 = vmatprep.subr.mxu0 0.0
    %453 = vmatpush1.msra.mxu0 0.0
    %454 = vmatprep.subr.mxu0 0.0
    %455 = vmatpush1.msra.mxu0 0.0
    %456 = vmatprep.subr.mxu0 0.0
    %457 = vmatpush1.msra.mxu0 0.0
    %458 = vmatprep.subr.mxu0 0.0
    %459 = vmatpush1.msra.mxu0 0.0
    %460 = vmatprep.subr.mxu0 0.0
    %461 = vmatpush1.msra.mxu0 0.0
    %462 = vmatprep.subr.mxu0 0.0
    %463 = vmatpush1.msra.mxu0 0.0
    %464 = vmatprep.subr.mxu0 0.0
    %465 = vmatpush1.msra.mxu0 0.0
    %466 = vmatprep.subr.mxu0 0.0
    %467 = vmatpush1.msra.mxu0 0.0
    %468 = vmatprep.subr.mxu0 0.0
    %469 = vmatpush1.msra.mxu0 0.0
    %470 = vmatprep.subr.mxu0 0.0
    %471 = vmatpush1.msra.mxu0 0.0
    %472 = vmatprep.subr.mxu0 0.0
    %473 = vmatpush1.msra.mxu0 0.0
    %474 = vmatprep.subr.mxu0 0.0
    %475 = vmatpush1.msra.mxu0 0.0
    %476 = vmatprep.subr.mxu0 0.0
    %477 = vmatpush1.msra.mxu0 0.0
    %478 = vmatprep.subr.mxu0 0.0
    %479 = vmatpush1.msra.mxu0 0.0
    %480 = vmatprep.subr.mxu0 0.0
    %481 = vmatpush1.msra.mxu0 0.0
    %482 = vmatprep.subr.mxu0 0.0
    %483 = vmatpush1.msra.mxu0 0.0
    %484 = vmatprep.subr.mxu0 0.0
    %485 = vmatpush1.msra.mxu0 0.0
    %486 = vmatprep.subr.mxu0 0.0
    %487 = vmatpush1.msra.mxu0 0.0
    %488 = vmatprep.subr.mxu0 0.0
    %489 = vmatpush1.msra.mxu0 0.0
    %490 = vmatprep.mubr.f32.mxu0 0.0
    %491 = vmatmul.mubr.f32.gmra.mrb[0].mxu0 %v331
    %v492 = vpop.f32.mrb[0].mxu0
    %v493 = vadd.f32 0.0, %v492
    %v494 = vpop.f32.mrb[0].mxu0
    %495 = vdwg.mxu0
    %497 = vrot.lane.b32.xlu0 %v425, 32
    %v498 = vpop.permute.xlu0 %497
    %v499 = vsel %vm161, %v498, 0
    %501 = vmatprep.subr.mxu0 0.0
    %502 = vmatpush1.msra.mxu0 %v63
    %503 = vmatprep.subr.mxu0 0.0
    %504 = vmatpush1.msra.mxu0 %v64
    %505 = vmatprep.subr.mxu0 0.0
    %506 = vmatpush1.msra.mxu0 %v65
    %507 = vmatprep.subr.mxu0 0.0
    %508 = vmatpush1.msra.mxu0 %v66
    %509 = vmatprep.subr.mxu0 0.0
    %510 = vmatpush1.msra.mxu0 0.0
    %511 = vmatprep.subr.mxu0 0.0
    %512 = vmatpush1.msra.mxu0 0.0
    %513 = vmatprep.subr.mxu0 0.0
    %514 = vmatpush1.msra.mxu0 0.0
    %515 = vmatprep.subr.mxu0 0.0
    %516 = vmatpush1.msra.mxu0 0.0
    %517 = vmatprep.subr.mxu0 0.0
    %518 = vmatpush1.msra.mxu0 0.0
    %519 = vmatprep.subr.mxu0 0.0
    %520 = vmatpush1.msra.mxu0 0.0
    %521 = vmatprep.subr.mxu0 0.0
    %522 = vmatpush1.msra.mxu0 0.0
    %523 = vmatprep.subr.mxu0 0.0
    %524 = vmatpush1.msra.mxu0 0.0
    %525 = vmatprep.subr.mxu0 0.0
    %526 = vmatpush1.msra.mxu0 0.0
    %527 = vmatprep.subr.mxu0 0.0
    %528 = vmatpush1.msra.mxu0 0.0
    %529 = vmatprep.subr.mxu0 0.0
    %530 = vmatpush1.msra.mxu0 0.0
    %531 = vmatprep.subr.mxu0 0.0
    %532 = vmatpush1.msra.mxu0 0.0
    %533 = vmatprep.subr.mxu0 0.0
    %534 = vmatpush1.msra.mxu0 0.0
    %535 = vmatprep.subr.mxu0 0.0
    %536 = vmatpush1.msra.mxu0 0.0
    %537 = vmatprep.subr.mxu0 0.0
    %538 = vmatpush1.msra.mxu0 0.0
    %539 = vmatprep.subr.mxu0 0.0
    %540 = vmatpush1.msra.mxu0 0.0
    %541 = vmatprep.subr.mxu0 0.0
    %542 = vmatpush1.msra.mxu0 0.0
    %543 = vmatprep.subr.mxu0 0.0
    %544 = vmatpush1.msra.mxu0 0.0
    %545 = vmatprep.subr.mxu0 0.0
    %546 = vmatpush1.msra.mxu0 0.0
    %547 = vmatprep.subr.mxu0 0.0
    %548 = vmatpush1.msra.mxu0 0.0
    %549 = vmatprep.subr.mxu0 0.0
    %550 = vmatpush1.msra.mxu0 0.0
    %551 = vmatprep.subr.mxu0 0.0
    %552 = vmatpush1.msra.mxu0 0.0
    %553 = vmatprep.subr.mxu0 0.0
    %554 = vmatpush1.msra.mxu0 0.0
    %555 = vmatprep.subr.mxu0 0.0
    %556 = vmatpush1.msra.mxu0 0.0
    %557 = vmatprep.subr.mxu0 0.0
    %558 = vmatpush1.msra.mxu0 0.0
    %559 = vmatprep.subr.mxu0 0.0
    %560 = vmatpush1.msra.mxu0 0.0
    %561 = vmatprep.subr.mxu0 0.0
    %562 = vmatpush1.msra.mxu0 0.0
    %563 = vmatprep.subr.mxu0 0.0
    %564 = vmatpush1.msra.mxu0 0.0
    %565 = vmatprep.mubr.f32.mxu0 0.0
    %566 = vmatmul.mubr.f32.gmra.mrb[0].mxu0 %v499
    %v567 = vpop.f32.mrb[0].mxu0
    %v568 = vadd.f32 0.0, %v567
    %v569 = vpop.f32.mrb[0].mxu0
    %570 = vdwg.mxu0
    %v572 = vrot.slane %v493, 6
    %v574 = vadd.f32 %v153, %v572
    %v575 = vmul.f32 %v574, 0.5
    %v576 = vtanh.pop %v575
    %v577 = vmul.f32 %v576, 0.5
    %v578 = vadd.f32 %v577, 0.5
    %v579 = vtanh.pop %v574
    %v581 = vrot.slane %v321, 6
    %v583 = vmul.f32 %v578, %v581
    %585 = vrot.lane.b32.xlu0 %v579, 64
    %v586 = vpop.permute.xlu0 %585
    %v588 = vmul.f32 %v578, %v586
    %590 = vrot.lane.b32.xlu0 %v588, 32
    %v591 = vpop.permute.xlu0 %590
    %v593 = vadd.f32 %v583, %v591
    %v594 = vtanh.pop %v593
    %596 = vrot.lane.b32.xlu0 %v594, 64
    %v597 = vpop.permute.xlu0 %596
    %v599 = vmul.f32 %v578, %v597
    %v601 = vrot.slane %v599, 2
    %602 = vrot.lane.b32.xlu0 %v601, 32
    %v603 = vpop.permute.xlu0 %602
    %v604 = vsel %vm161, %v603, 0
    %606 = vmatprep.subr.mxu0 0.0
    %607 = vmatpush1.msra.mxu0 %v59
    %608 = vmatprep.subr.mxu0 0.0
    %609 = vmatpush1.msra.mxu0 %v60
    %610 = vmatprep.subr.mxu0 0.0
    %611 = vmatpush1.msra.mxu0 %v61
    %612 = vmatprep.subr.mxu0 0.0
    %613 = vmatpush1.msra.mxu0 %v62
    %614 = vmatprep.subr.mxu0 0.0
    %615 = vmatpush1.msra.mxu0 0.0
    %616 = vmatprep.subr.mxu0 0.0
    %617 = vmatpush1.msra.mxu0 0.0
    %618 = vmatprep.subr.mxu0 0.0
    %619 = vmatpush1.msra.mxu0 0.0
    %620 = vmatprep.subr.mxu0 0.0
    %621 = vmatpush1.msra.mxu0 0.0
    %622 = vmatprep.subr.mxu0 0.0
    %623 = vmatpush1.msra.mxu0 0.0
    %624 = vmatprep.subr.mxu0 0.0
    %625 = vmatpush1.msra.mxu0 0.0
    %626 = vmatprep.subr.mxu0 0.0
    %627 = vmatpush1.msra.mxu0 0.0
    %628 = vmatprep.subr.mxu0 0.0
    %629 = vmatpush1.msra.mxu0 0.0
    %630 = vmatprep.subr.mxu0 0.0
    %631 = vmatpush1.msra.mxu0 0.0
    %632 = vmatprep.subr.mxu0 0.0
    %633 = vmatpush1.msra.mxu0 0.0
    %634 = vmatprep.subr.mxu0 0.0
    %635 = vmatpush1.msra.mxu0 0.0
    %636 = vmatprep.subr.mxu0 0.0
    %637 = vmatpush1.msra.mxu0 0.0
    %638 = vmatprep.subr.mxu0 0.0
    %639 = vmatpush1.msra.mxu0 0.0
    %640 = vmatprep.subr.mxu0 0.0
    %641 = vmatpush1.msra.mxu0 0.0
    %642 = vmatprep.subr.mxu0 0.0
    %643 = vmatpush1.msra.mxu0 0.0
    %644 = vmatprep.subr.mxu0 0.0
    %645 = vmatpush1.msra.mxu0 0.0
    %646 = vmatprep.subr.mxu0 0.0
    %647 = vmatpush1.msra.mxu0 0.0
    %648 = vmatprep.subr.mxu0 0.0
    %649 = vmatpush1.msra.mxu0 0.0
    %650 = vmatprep.subr.mxu0 0.0
    %651 = vmatpush1.msra.mxu0 0.0
    %652 = vmatprep.subr.mxu0 0.0
    %653 = vmatpush1.msra.mxu0 0.0
    %654 = vmatprep.subr.mxu0 0.0
    %655 = vmatpush1.msra.mxu0 0.0
    %656 = vmatprep.subr.mxu0 0.0
    %657 = vmatpush1.msra.mxu0 0.0
    %658 = vmatprep.subr.mxu0 0.0
    %659 = vmatpush1.msra.mxu0 0.0
    %660 = vmatprep.subr.mxu0 0.0
    %661 = vmatpush1.msra.mxu0 0.0
    %662 = vmatprep.subr.mxu0 0.0
    %663 = vmatpush1.msra.mxu0 0.0
    %664 = vmatprep.subr.mxu0 0.0
    %665 = vmatpush1.msra.mxu0 0.0
    %666 = vmatprep.subr.mxu0 0.0
    %667 = vmatpush1.msra.mxu0 0.0
    %668 = vmatprep.subr.mxu0 0.0
    %669 = vmatpush1.msra.mxu0 0.0
    %670 = vmatprep.mubr.f32.mxu0 0.0
    %671 = vmatmul.mubr.f32.gmra.mrb[0].mxu0 %v604
    %v672 = vpop.f32.mrb[0].mxu0
    %v673 = vadd.f32 %v568, %v672
    %v674 = vpop.f32.mrb[0].mxu0
    %675 = vdwg.mxu0
    %v676 = vadd.f32 %v673, %v71
    %v677 = vmul.f32 %v676, 0.5
    %v678 = vtanh.pop %v677
    %v679 = vmul.f32 %v678, 0.5
    %v680 = vadd.f32 %v679, 0.5
    %v681 = vtanh.pop %v676
    %v682 = vmul.f32 %v680, %v419
    %684 = vrot.lane.b32.xlu0 %v681, 64
    %v685 = vpop.permute.xlu0 %684
    %v687 = vmul.f32 %v680, %v685
    %689 = vrot.lane.b32.xlu0 %v687, 32
    %v690 = vpop.permute.xlu0 %689
    %v692 = vadd.f32 %v682, %v690
    %v693 = vtanh.pop %v692
    %695 = vrot.lane.b32.xlu0 %v693, 64
    %v696 = vpop.permute.xlu0 %695
    %v698 = vmul.f32 %v680, %v696
    %699 = vmatprep.subr.mxu0 0.0
    %700 = vmatpush1.msra.mxu0 %v55
    %701 = vmatprep.subr.mxu0 0.0
    %702 = vmatpush1.msra.mxu0 %v56
    %703 = vmatprep.subr.mxu0 0.0
    %704 = vmatpush1.msra.mxu0 %v57
    %705 = vmatprep.subr.mxu0 0.0
    %706 = vmatpush1.msra.mxu0 %v58
    %707 = vmatprep.subr.mxu0 0.0
    %708 = vmatpush1.msra.mxu0 0.0
    %709 = vmatprep.subr.mxu0 0.0
    %710 = vmatpush1.msra.mxu0 0.0
    %711 = vmatprep.subr.mxu0 0.0
    %712 = vmatpush1.msra.mxu0 0.0
    %713 = vmatprep.subr.mxu0 0.0
    %714 = vmatpush1.msra.mxu0 0.0
    %715 = vmatprep.subr.mxu0 0.0
    %716 = vmatpush1.msra.mxu0 0.0
    %717 = vmatprep.subr.mxu0 0.0
    %718 = vmatpush1.msra.mxu0 0.0
    %719 = vmatprep.subr.mxu0 0.0
    %720 = vmatpush1.msra.mxu0 0.0
    %721 = vmatprep.subr.mxu0 0.0
    %722 = vmatpush1.msra.mxu0 0.0
    %723 = vmatprep.subr.mxu0 0.0
    %724 = vmatpush1.msra.mxu0 0.0
    %725 = vmatprep.subr.mxu0 0.0
    %726 = vmatpush1.msra.mxu0 0.0
    %727 = vmatprep.subr.mxu0 0.0
    %728 = vmatpush1.msra.mxu0 0.0
    %729 = vmatprep.subr.mxu0 0.0
    %730 = vmatpush1.msra.mxu0 0.0
    %731 = vmatprep.subr.mxu0 0.0
    %732 = vmatpush1.msra.mxu0 0.0
    %733 = vmatprep.subr.mxu0 0.0
    %734 = vmatpush1.msra.mxu0 0.0
    %735 = vmatprep.subr.mxu0 0.0
    %736 = vmatpush1.msra.mxu0 0.0
    %737 = vmatprep.subr.mxu0 0.0
    %738 = vmatpush1.msra.mxu0 0.0
    %739 = vmatprep.subr.mxu0 0.0
    %740 = vmatpush1.msra.mxu0 0.0
    %741 = vmatprep.subr.mxu0 0.0
    %742 = vmatpush1.msra.mxu0 0.0
    %743 = vmatprep.subr.mxu0 0.0
    %744 = vmatpush1.msra.mxu0 0.0
    %745 = vmatprep.subr.mxu0 0.0
    %746 = vmatpush1.msra.mxu0 0.0
    %747 = vmatprep.subr.mxu0 0.0
    %748 = vmatpush1.msra.mxu0 0.0
    %749 = vmatprep.subr.mxu0 0.0
    %750 = vmatpush1.msra.mxu0 0.0
    %751 = vmatprep.subr.mxu0 0.0
    %752 = vmatpush1.msra.mxu0 0.0
    %753 = vmatprep.subr.mxu0 0.0
    %754 = vmatpush1.msra.mxu0 0.0
    %755 = vmatprep.subr.mxu0 0.0
    %756 = vmatpush1.msra.mxu0 0.0
    %757 = vmatprep.subr.mxu0 0.0
    %758 = vmatpush1.msra.mxu0 0.0
    %759 = vmatprep.subr.mxu0 0.0
    %760 = vmatpush1.msra.mxu0 0.0
    %761 = vmatprep.subr.mxu0 0.0
    %762 = vmatpush1.msra.mxu0 0.0
    %763 = vmatprep.mubr.f32.mxu0 0.0
    %764 = vmatmul.mubr.f32.gmra.mrb[0].mxu0 %v604
    %v765 = vpop.f32.mrb[0].mxu0
    %v766 = vadd.f32 0.0, %v765
    %v767 = vpop.f32.mrb[0].mxu0
    %768 = vdwg.mxu0
    %770 = vrot.lane.b32.xlu0 %v698, 32
    %v771 = vpop.permute.xlu0 %770
    %v772 = vsel %vm161, %v771, 0
    %774 = vmatprep.subr.mxu0 0.0
    %775 = vmatpush1.msra.mxu0 %v63
    %776 = vmatprep.subr.mxu0 0.0
    %777 = vmatpush1.msra.mxu0 %v64
    %778 = vmatprep.subr.mxu0 0.0
    %779 = vmatpush1.msra.mxu0 %v65
    %780 = vmatprep.subr.mxu0 0.0
    %781 = vmatpush1.msra.mxu0 %v66
    %782 = vmatprep.subr.mxu0 0.0
    %783 = vmatpush1.msra.mxu0 0.0
    %784 = vmatprep.subr.mxu0 0.0
    %785 = vmatpush1.msra.mxu0 0.0
    %786 = vmatprep.subr.mxu0 0.0
    %787 = vmatpush1.msra.mxu0 0.0
    %788 = vmatprep.subr.mxu0 0.0
    %789 = vmatpush1.msra.mxu0 0.0
    %790 = vmatprep.subr.mxu0 0.0
    %791 = vmatpush1.msra.mxu0 0.0
    %792 = vmatprep.subr.mxu0 0.0
    %793 = vmatpush1.msra.mxu0 0.0
    %794 = vmatprep.subr.mxu0 0.0
    %795 = vmatpush1.msra.mxu0 0.0
    %796 = vmatprep.subr.mxu0 0.0
    %797 = vmatpush1.msra.mxu0 0.0
    %798 = vmatprep.subr.mxu0 0.0
    %799 = vmatpush1.msra.mxu0 0.0
    %800 = vmatprep.subr.mxu0 0.0
    %801 = vmatpush1.msra.mxu0 0.0
    %802 = vmatprep.subr.mxu0 0.0
    %803 = vmatpush1.msra.mxu0 0.0
    %804 = vmatprep.subr.mxu0 0.0
    %805 = vmatpush1.msra.mxu0 0.0
    %806 = vmatprep.subr.mxu0 0.0
    %807 = vmatpush1.msra.mxu0 0.0
    %808 = vmatprep.subr.mxu0 0.0
    %809 = vmatpush1.msra.mxu0 0.0
    %810 = vmatprep.subr.mxu0 0.0
    %811 = vmatpush1.msra.mxu0 0.0
    %812 = vmatprep.subr.mxu0 0.0
    %813 = vmatpush1.msra.mxu0 0.0
    %814 = vmatprep.subr.mxu0 0.0
    %815 = vmatpush1.msra.mxu0 0.0
    %816 = vmatprep.subr.mxu0 0.0
    %817 = vmatpush1.msra.mxu0 0.0
    %818 = vmatprep.subr.mxu0 0.0
    %819 = vmatpush1.msra.mxu0 0.0
    %820 = vmatprep.subr.mxu0 0.0
    %821 = vmatpush1.msra.mxu0 0.0
    %822 = vmatprep.subr.mxu0 0.0
    %823 = vmatpush1.msra.mxu0 0.0
    %824 = vmatprep.subr.mxu0 0.0
    %825 = vmatpush1.msra.mxu0 0.0
    %826 = vmatprep.subr.mxu0 0.0
    %827 = vmatpush1.msra.mxu0 0.0
    %828 = vmatprep.subr.mxu0 0.0
    %829 = vmatpush1.msra.mxu0 0.0
    %830 = vmatprep.subr.mxu0 0.0
    %831 = vmatpush1.msra.mxu0 0.0
    %832 = vmatprep.subr.mxu0 0.0
    %833 = vmatpush1.msra.mxu0 0.0
    %834 = vmatprep.subr.mxu0 0.0
    %835 = vmatpush1.msra.mxu0 0.0
    %836 = vmatprep.subr.mxu0 0.0
    %837 = vmatpush1.msra.mxu0 0.0
    %838 = vmatprep.mubr.f32.mxu0 0.0
    %839 = vmatmul.mubr.f32.gmra.mrb[0].mxu0 %v772
    %v840 = vpop.f32.mrb[0].mxu0
    %v841 = vadd.f32 0.0, %v840
    %v842 = vpop.f32.mrb[0].mxu0
    %843 = vdwg.mxu0
    %v845 = vrot.slane %v766, 4
    %v847 = vadd.f32 %v153, %v845
    %v848 = vmul.f32 %v847, 0.5
    %v849 = vtanh.pop %v848
    %v850 = vmul.f32 %v849, 0.5
    %v851 = vadd.f32 %v850, 0.5
    %v852 = vtanh.pop %v847
    %v854 = vrot.slane %v593, 6
    %v856 = vmul.f32 %v851, %v854
    %858 = vrot.lane.b32.xlu0 %v852, 64
    %v859 = vpop.permute.xlu0 %858
    %v861 = vmul.f32 %v851, %v859
    %863 = vrot.lane.b32.xlu0 %v861, 32
    %v864 = vpop.permute.xlu0 %863
    %v866 = vadd.f32 %v856, %v864
    %v867 = vtanh.pop %v866
    %869 = vrot.lane.b32.xlu0 %v867, 64
    %v870 = vpop.permute.xlu0 %869
    %v872 = vmul.f32 %v851, %v870
    %v874 = vrot.slane %v872, 4
    %875 = vrot.lane.b32.xlu0 %v874, 32
    %v876 = vpop.permute.xlu0 %875
    %v877 = vsel %vm161, %v876, 0
    %879 = vmatprep.subr.mxu0 0.0
    %880 = vmatpush1.msra.mxu0 %v59
    %881 = vmatprep.subr.mxu0 0.0
    %882 = vmatpush1.msra.mxu0 %v60
    %883 = vmatprep.subr.mxu0 0.0
    %884 = vmatpush1.msra.mxu0 %v61
    %885 = vmatprep.subr.mxu0 0.0
    %886 = vmatpush1.msra.mxu0 %v62
    %887 = vmatprep.subr.mxu0 0.0
    %888 = vmatpush1.msra.mxu0 0.0
    %889 = vmatprep.subr.mxu0 0.0
    %890 = vmatpush1.msra.mxu0 0.0
    %891 = vmatprep.subr.mxu0 0.0
    %892 = vmatpush1.msra.mxu0 0.0
    %893 = vmatprep.subr.mxu0 0.0
    %894 = vmatpush1.msra.mxu0 0.0
    %895 = vmatprep.subr.mxu0 0.0
    %896 = vmatpush1.msra.mxu0 0.0
    %897 = vmatprep.subr.mxu0 0.0
    %898 = vmatpush1.msra.mxu0 0.0
    %899 = vmatprep.subr.mxu0 0.0
    %900 = vmatpush1.msra.mxu0 0.0
    %901 = vmatprep.subr.mxu0 0.0
    %902 = vmatpush1.msra.mxu0 0.0
    %903 = vmatprep.subr.mxu0 0.0
    %904 = vmatpush1.msra.mxu0 0.0
    %905 = vmatprep.subr.mxu0 0.0
    %906 = vmatpush1.msra.mxu0 0.0
    %907 = vmatprep.subr.mxu0 0.0
    %908 = vmatpush1.msra.mxu0 0.0
    %909 = vmatprep.subr.mxu0 0.0
    %910 = vmatpush1.msra.mxu0 0.0
    %911 = vmatprep.subr.mxu0 0.0
    %912 = vmatpush1.msra.mxu0 0.0
    %913 = vmatprep.subr.mxu0 0.0
    %914 = vmatpush1.msra.mxu0 0.0
    %915 = vmatprep.subr.mxu0 0.0
    %916 = vmatpush1.msra.mxu0 0.0
    %917 = vmatprep.subr.mxu0 0.0
    %918 = vmatpush1.msra.mxu0 0.0
    %919 = vmatprep.subr.mxu0 0.0
    %920 = vmatpush1.msra.mxu0 0.0
    %921 = vmatprep.subr.mxu0 0.0
    %922 = vmatpush1.msra.mxu0 0.0
    %923 = vmatprep.subr.mxu0 0.0
    %924 = vmatpush1.msra.mxu0 0.0
    %925 = vmatprep.subr.mxu0 0.0
    %926 = vmatpush1.msra.mxu0 0.0
    %927 = vmatprep.subr.mxu0 0.0
    %928 = vmatpush1.msra.mxu0 0.0
    %929 = vmatprep.subr.mxu0 0.0
    %930 = vmatpush1.msra.mxu0 0.0
    %931 = vmatprep.subr.mxu0 0.0
    %932 = vmatpush1.msra.mxu0 0.0
    %933 = vmatprep.subr.mxu0 0.0
    %934 = vmatpush1.msra.mxu0 0.0
    %935 = vmatprep.subr.mxu0 0.0
    %936 = vmatpush1.msra.mxu0 0.0
    %937 = vmatprep.subr.mxu0 0.0
    %938 = vmatpush1.msra.mxu0 0.0
    %939 = vmatprep.subr.mxu0 0.0
    %940 = vmatpush1.msra.mxu0 0.0
    %941 = vmatprep.subr.mxu0 0.0
    %942 = vmatpush1.msra.mxu0 0.0
    %943 = vmatprep.mubr.f32.mxu0 0.0
    %944 = vmatmul.mubr.f32.gmra.mrb[0].mxu0 %v877
    %v945 = vpop.f32.mrb[0].mxu0
    %v946 = vadd.f32 %v841, %v945
    %v947 = vpop.f32.mrb[0].mxu0
    %948 = vdwg.mxu0
    %v949 = vadd.f32 %v946, %v71
    %v950 = vmul.f32 %v949, 0.5
    %v951 = vtanh.pop %v950
    %v952 = vmul.f32 %v951, 0.5
    %v953 = vadd.f32 %v952, 0.5
    %v954 = vtanh.pop %v949
    %v955 = vmul.f32 %v953, %v692
    %957 = vrot.lane.b32.xlu0 %v954, 64
    %v958 = vpop.permute.xlu0 %957
    %v960 = vmul.f32 %v953, %v958
    %962 = vrot.lane.b32.xlu0 %v960, 32
    %v963 = vpop.permute.xlu0 %962
    %v965 = vadd.f32 %v955, %v963
    %v966 = vtanh.pop %v965
    %968 = vrot.lane.b32.xlu0 %v966, 64
    %v969 = vpop.permute.xlu0 %968
    %v971 = vmul.f32 %v953, %v969
    %972 = vmatprep.subr.mxu0 0.0
    %973 = vmatpush1.msra.mxu0 %v55
    %974 = vmatprep.subr.mxu0 0.0
    %975 = vmatpush1.msra.mxu0 %v56
    %976 = vmatprep.subr.mxu0 0.0
    %977 = vmatpush1.msra.mxu0 %v57
    %978 = vmatprep.subr.mxu0 0.0
    %979 = vmatpush1.msra.mxu0 %v58
    %980 = vmatprep.subr.mxu0 0.0
    %981 = vmatpush1.msra.mxu0 0.0
    %982 = vmatprep.subr.mxu0 0.0
    %983 = vmatpush1.msra.mxu0 0.0
    %984 = vmatprep.subr.mxu0 0.0
    %985 = vmatpush1.msra.mxu0 0.0
    %986 = vmatprep.subr.mxu0 0.0
    %987 = vmatpush1.msra.mxu0 0.0
    %988 = vmatprep.subr.mxu0 0.0
    %989 = vmatpush1.msra.mxu0 0.0
    %990 = vmatprep.subr.mxu0 0.0
    %991 = vmatpush1.msra.mxu0 0.0
    %992 = vmatprep.subr.mxu0 0.0
    %993 = vmatpush1.msra.mxu0 0.0
    %994 = vmatprep.subr.mxu0 0.0
    %995 = vmatpush1.msra.mxu0 0.0
    %996 = vmatprep.subr.mxu0 0.0
    %997 = vmatpush1.msra.mxu0 0.0
    %998 = vmatprep.subr.mxu0 0.0
    %999 = vmatpush1.msra.mxu0 0.0
    %1000 = vmatprep.subr.mxu0 0.0
    %1001 = vmatpush1.msra.mxu0 0.0
    %1002 = vmatprep.subr.mxu0 0.0
    %1003 = vmatpush1.msra.mxu0 0.0
    %1004 = vmatprep.subr.mxu0 0.0
    %1005 = vmatpush1.msra.mxu0 0.0
    %1006 = vmatprep.subr.mxu0 0.0
    %1007 = vmatpush1.msra.mxu0 0.0
    %1008 = vmatprep.subr.mxu0 0.0
    %1009 = vmatpush1.msra.mxu0 0.0
    %1010 = vmatprep.subr.mxu0 0.0
    %1011 = vmatpush1.msra.mxu0 0.0
    %1012 = vmatprep.subr.mxu0 0.0
    %1013 = vmatpush1.msra.mxu0 0.0
    %1014 = vmatprep.subr.mxu0 0.0
    %1015 = vmatpush1.msra.mxu0 0.0
    %1016 = vmatprep.subr.mxu0 0.0
    %1017 = vmatpush1.msra.mxu0 0.0
    %1018 = vmatprep.subr.mxu0 0.0
    %1019 = vmatpush1.msra.mxu0 0.0
    %1020 = vmatprep.subr.mxu0 0.0
    %1021 = vmatpush1.msra.mxu0 0.0
    %1022 = vmatprep.subr.mxu0 0.0
    %1023 = vmatpush1.msra.mxu0 0.0
    %1024 = vmatprep.subr.mxu0 0.0
    %1025 = vmatpush1.msra.mxu0 0.0
    %1026 = vmatprep.subr.mxu0 0.0
    %1027 = vmatpush1.msra.mxu0 0.0
    %1028 = vmatprep.subr.mxu0 0.0
    %1029 = vmatpush1.msra.mxu0 0.0
    %1030 = vmatprep.subr.mxu0 0.0
    %1031 = vmatpush1.msra.mxu0 0.0
    %1032 = vmatprep.subr.mxu0 0.0
    %1033 = vmatpush1.msra.mxu0 0.0
    %1034 = vmatprep.subr.mxu0 0.0
    %1035 = vmatpush1.msra.mxu0 0.0
    %1036 = vmatprep.mubr.f32.mxu0 0.0
    %1037 = vmatmul.mubr.f32.gmra.mrb[0].mxu0 %v877
    %v1038 = vpop.f32.mrb[0].mxu0
    %v1039 = vadd.f32 0.0, %v1038
    %v1040 = vpop.f32.mrb[0].mxu0
    %1041 = vdwg.mxu0
    %1043 = vrot.lane.b32.xlu0 %v971, 32
    %v1044 = vpop.permute.xlu0 %1043
    %v1045 = vsel %vm161, %v1044, 0
    %1047 = vmatprep.subr.mxu0 0.0
    %1048 = vmatpush1.msra.mxu0 %v63
    %1049 = vmatprep.subr.mxu0 0.0
    %1050 = vmatpush1.msra.mxu0 %v64
    %1051 = vmatprep.subr.mxu0 0.0
    %1052 = vmatpush1.msra.mxu0 %v65
    %1053 = vmatprep.subr.mxu0 0.0
    %1054 = vmatpush1.msra.mxu0 %v66
    %1055 = vmatprep.subr.mxu0 0.0
    %1056 = vmatpush1.msra.mxu0 0.0
    %1057 = vmatprep.subr.mxu0 0.0
    %1058 = vmatpush1.msra.mxu0 0.0
    %1059 = vmatprep.subr.mxu0 0.0
    %1060 = vmatpush1.msra.mxu0 0.0
    %1061 = vmatprep.subr.mxu0 0.0
    %1062 = vmatpush1.msra.mxu0 0.0
    %1063 = vmatprep.subr.mxu0 0.0
    %1064 = vmatpush1.msra.mxu0 0.0
    %1065 = vmatprep.subr.mxu0 0.0
    %1066 = vmatpush1.msra.mxu0 0.0
    %1067 = vmatprep.subr.mxu0 0.0
    %1068 = vmatpush1.msra.mxu0 0.0
    %1069 = vmatprep.subr.mxu0 0.0
    %1070 = vmatpush1.msra.mxu0 0.0
    %1071 = vmatprep.subr.mxu0 0.0
    %1072 = vmatpush1.msra.mxu0 0.0
    %1073 = vmatprep.subr.mxu0 0.0
    %1074 = vmatpush1.msra.mxu0 0.0
    %1075 = vmatprep.subr.mxu0 0.0
    %1076 = vmatpush1.msra.mxu0 0.0
    %1077 = vmatprep.subr.mxu0 0.0
    %1078 = vmatpush1.msra.mxu0 0.0
    %1079 = vmatprep.subr.mxu0 0.0
    %1080 = vmatpush1.msra.mxu0 0.0
    %1081 = vmatprep.subr.mxu0 0.0
    %1082 = vmatpush1.msra.mxu0 0.0
    %1083 = vmatprep.subr.mxu0 0.0
    %1084 = vmatpush1.msra.mxu0 0.0
    %1085 = vmatprep.subr.mxu0 0.0
    %1086 = vmatpush1.msra.mxu0 0.0
    %1087 = vmatprep.subr.mxu0 0.0
    %1088 = vmatpush1.msra.mxu0 0.0
    %1089 = vmatprep.subr.mxu0 0.0
    %1090 = vmatpush1.msra.mxu0 0.0
    %1091 = vmatprep.subr.mxu0 0.0
    %1092 = vmatpush1.msra.mxu0 0.0
    %1093 = vmatprep.subr.mxu0 0.0
    %1094 = vmatpush1.msra.mxu0 0.0
    %1095 = vmatprep.subr.mxu0 0.0
    %1096 = vmatpush1.msra.mxu0 0.0
    %1097 = vmatprep.subr.mxu0 0.0
    %1098 = vmatpush1.msra.mxu0 0.0
    %1099 = vmatprep.subr.mxu0 0.0
    %1100 = vmatpush1.msra.mxu0 0.0
    %1101 = vmatprep.subr.mxu0 0.0
    %1102 = vmatpush1.msra.mxu0 0.0
    %1103 = vmatprep.subr.mxu0 0.0
    %1104 = vmatpush1.msra.mxu0 0.0
    %1105 = vmatprep.subr.mxu0 0.0
    %1106 = vmatpush1.msra.mxu0 0.0
    %1107 = vmatprep.subr.mxu0 0.0
    %1108 = vmatpush1.msra.mxu0 0.0
    %1109 = vmatprep.subr.mxu0 0.0
    %1110 = vmatpush1.msra.mxu0 0.0
    %1111 = vmatprep.mubr.f32.mxu0 0.0
    %1112 = vmatmul.mubr.f32.gmra.mrb[0].mxu0 %v1045
    %v1113 = vpop.f32.mrb[0].mxu0
    %v1114 = vadd.f32 0.0, %v1113
    %v1115 = vpop.f32.mrb[0].mxu0
    %1116 = vdwg.mxu0
    %v1118 = vrot.slane %v1039, 2
    %v1120 = vadd.f32 %v153, %v1118
    %v1121 = vmul.f32 %v1120, 0.5
    %v1122 = vtanh.pop %v1121
    %v1123 = vmul.f32 %v1122, 0.5
    %v1124 = vadd.f32 %v1123, 0.5
    %v1125 = vtanh.pop %v1120
    %v1127 = vrot.slane %v866, 6
    %v1129 = vmul.f32 %v1124, %v1127
    %1131 = vrot.lane.b32.xlu0 %v1125, 64
    %v1132 = vpop.permute.xlu0 %1131
    %v1134 = vmul.f32 %v1124, %v1132
    %1136 = vrot.lane.b32.xlu0 %v1134, 32
    %v1137 = vpop.permute.xlu0 %1136
    %v1139 = vadd.f32 %v1129, %v1137
    %v1140 = vtanh.pop %v1139
    %1142 = vrot.lane.b32.xlu0 %v1140, 64
    %v1143 = vpop.permute.xlu0 %1142
    %v1145 = vmul.f32 %v1124, %v1143
    %v1147 = vrot.slane %v1145, 6
    %1148 = vrot.lane.b32.xlu0 %v1147, 32
    %v1149 = vpop.permute.xlu0 %1148
    %v1150 = vsel %vm161, %v1149, 0
    %1152 = vmatprep.subr.mxu0 0.0
    %1153 = vmatpush1.msra.mxu0 %v59
    %1154 = vmatprep.subr.mxu0 0.0
    %1155 = vmatpush1.msra.mxu0 %v60
    %1156 = vmatprep.subr.mxu0 0.0
    %1157 = vmatpush1.msra.mxu0 %v61
    %1158 = vmatprep.subr.mxu0 0.0
    %1159 = vmatpush1.msra.mxu0 %v62
    %1160 = vmatprep.subr.mxu0 0.0
    %1161 = vmatpush1.msra.mxu0 0.0
    %1162 = vmatprep.subr.mxu0 0.0
    %1163 = vmatpush1.msra.mxu0 0.0
    %1164 = vmatprep.subr.mxu0 0.0
    %1165 = vmatpush1.msra.mxu0 0.0
    %1166 = vmatprep.subr.mxu0 0.0
    %1167 = vmatpush1.msra.mxu0 0.0
    %1168 = vmatprep.subr.mxu0 0.0
    %1169 = vmatpush1.msra.mxu0 0.0
    %1170 = vmatprep.subr.mxu0 0.0
    %1171 = vmatpush1.msra.mxu0 0.0
    %1172 = vmatprep.subr.mxu0 0.0
    %1173 = vmatpush1.msra.mxu0 0.0
    %1174 = vmatprep.subr.mxu0 0.0
    %1175 = vmatpush1.msra.mxu0 0.0
    %1176 = vmatprep.subr.mxu0 0.0
    %1177 = vmatpush1.msra.mxu0 0.0
    %1178 = vmatprep.subr.mxu0 0.0
    %1179 = vmatpush1.msra.mxu0 0.0
    %1180 = vmatprep.subr.mxu0 0.0
    %1181 = vmatpush1.msra.mxu0 0.0
    %1182 = vmatprep.subr.mxu0 0.0
    %1183 = vmatpush1.msra.mxu0 0.0
    %1184 = vmatprep.subr.mxu0 0.0
    %1185 = vmatpush1.msra.mxu0 0.0
    %1186 = vmatprep.subr.mxu0 0.0
    %1187 = vmatpush1.msra.mxu0 0.0
    %1188 = vmatprep.subr.mxu0 0.0
    %1189 = vmatpush1.msra.mxu0 0.0
    %1190 = vmatprep.subr.mxu0 0.0
    %1191 = vmatpush1.msra.mxu0 0.0
    %1192 = vmatprep.subr.mxu0 0.0
    %1193 = vmatpush1.msra.mxu0 0.0
    %1194 = vmatprep.subr.mxu0 0.0
    %1195 = vmatpush1.msra.mxu0 0.0
    %1196 = vmatprep.subr.mxu0 0.0
    %1197 = vmatpush1.msra.mxu0 0.0
    %1198 = vmatprep.subr.mxu0 0.0
    %1199 = vmatpush1.msra.mxu0 0.0
    %1200 = vmatprep.subr.mxu0 0.0
    %1201 = vmatpush1.msra.mxu0 0.0
    %1202 = vmatprep.subr.mxu0 0.0
    %1203 = vmatpush1.msra.mxu0 0.0
    %1204 = vmatprep.subr.mxu0 0.0
    %1205 = vmatpush1.msra.mxu0 0.0
    %1206 = vmatprep.subr.mxu0 0.0
    %1207 = vmatpush1.msra.mxu0 0.0
    %1208 = vmatprep.subr.mxu0 0.0
    %1209 = vmatpush1.msra.mxu0 0.0
    %1210 = vmatprep.subr.mxu0 0.0
    %1211 = vmatpush1.msra.mxu0 0.0
    %1212 = vmatprep.subr.mxu0 0.0
    %1213 = vmatpush1.msra.mxu0 0.0
    %1214 = vmatprep.subr.mxu0 0.0
    %1215 = vmatpush1.msra.mxu0 0.0
    %1216 = vmatprep.mubr.f32.mxu0 0.0
    %1217 = vmatmul.mubr.f32.gmra.mrb[0].mxu0 %v1150
    %v1218 = vpop.f32.mrb[0].mxu0
    %v1219 = vadd.f32 %v1114, %v1218
    %v1220 = vpop.f32.mrb[0].mxu0
    %1221 = vdwg.mxu0
    %v1222 = vadd.f32 %v1219, %v71
    %v1223 = vmul.f32 %v1222, 0.5
    %v1224 = vtanh.pop %v1223
    %v1225 = vmul.f32 %v1224, 0.5
    %v1226 = vadd.f32 %v1225, 0.5
    %v1227 = vtanh.pop %v1222
    %v1228 = vmul.f32 %v1226, %v965
    %1230 = vrot.lane.b32.xlu0 %v1227, 64
    %v1231 = vpop.permute.xlu0 %1230
    %v1233 = vmul.f32 %v1226, %v1231
    %1235 = vrot.lane.b32.xlu0 %v1233, 32
    %v1236 = vpop.permute.xlu0 %1235
    %v1238 = vadd.f32 %v1228, %v1236
    %v1239 = vtanh.pop %v1238
    %1241 = vrot.lane.b32.xlu0 %v1239, 64
    %v1242 = vpop.permute.xlu0 %1241
    %v1244 = vmul.f32 %v1226, %v1242
    %1245 = vmatprep.subr.mxu0 0.0
    %1246 = vmatpush1.msra.mxu0 %v55
    %1247 = vmatprep.subr.mxu0 0.0
    %1248 = vmatpush1.msra.mxu0 %v56
    %1249 = vmatprep.subr.mxu0 0.0
    %1250 = vmatpush1.msra.mxu0 %v57
    %1251 = vmatprep.subr.mxu0 0.0
    %1252 = vmatpush1.msra.mxu0 %v58
    %1253 = vmatprep.subr.mxu0 0.0
    %1254 = vmatpush1.msra.mxu0 0.0
    %1255 = vmatprep.subr.mxu0 0.0
    %1256 = vmatpush1.msra.mxu0 0.0
    %1257 = vmatprep.subr.mxu0 0.0
    %1258 = vmatpush1.msra.mxu0 0.0
    %1259 = vmatprep.subr.mxu0 0.0
    %1260 = vmatpush1.msra.mxu0 0.0
    %1261 = vmatprep.subr.mxu0 0.0
    %1262 = vmatpush1.msra.mxu0 0.0
    %1263 = vmatprep.subr.mxu0 0.0
    %1264 = vmatpush1.msra.mxu0 0.0
    %1265 = vmatprep.subr.mxu0 0.0
    %1266 = vmatpush1.msra.mxu0 0.0
    %1267 = vmatprep.subr.mxu0 0.0
    %1268 = vmatpush1.msra.mxu0 0.0
    %1269 = vmatprep.subr.mxu0 0.0
    %1270 = vmatpush1.msra.mxu0 0.0
    %1271 = vmatprep.subr.mxu0 0.0
    %1272 = vmatpush1.msra.mxu0 0.0
    %1273 = vmatprep.subr.mxu0 0.0
    %1274 = vmatpush1.msra.mxu0 0.0
    %1275 = vmatprep.subr.mxu0 0.0
    %1276 = vmatpush1.msra.mxu0 0.0
    %1277 = vmatprep.subr.mxu0 0.0
    %1278 = vmatpush1.msra.mxu0 0.0
    %1279 = vmatprep.subr.mxu0 0.0
    %1280 = vmatpush1.msra.mxu0 0.0
    %1281 = vmatprep.subr.mxu0 0.0
    %1282 = vmatpush1.msra.mxu0 0.0
    %1283 = vmatprep.subr.mxu0 0.0
    %1284 = vmatpush1.msra.mxu0 0.0
    %1285 = vmatprep.subr.mxu0 0.0
    %1286 = vmatpush1.msra.mxu0 0.0
    %1287 = vmatprep.subr.mxu0 0.0
    %1288 = vmatpush1.msra.mxu0 0.0
    %1289 = vmatprep.subr.mxu0 0.0
    %1290 = vmatpush1.msra.mxu0 0.0
    %1291 = vmatprep.subr.mxu0 0.0
    %1292 = vmatpush1.msra.mxu0 0.0
    %1293 = vmatprep.subr.mxu0 0.0
    %1294 = vmatpush1.msra.mxu0 0.0
    %1295 = vmatprep.subr.mxu0 0.0
    %1296 = vmatpush1.msra.mxu0 0.0
    %1297 = vmatprep.subr.mxu0 0.0
    %1298 = vmatpush1.msra.mxu0 0.0
    %1299 = vmatprep.subr.mxu0 0.0
    %1300 = vmatpush1.msra.mxu0 0.0
    %1301 = vmatprep.subr.mxu0 0.0
    %1302 = vmatpush1.msra.mxu0 0.0
    %1303 = vmatprep.subr.mxu0 0.0
    %1304 = vmatpush1.msra.mxu0 0.0
    %1305 = vmatprep.subr.mxu0 0.0
    %1306 = vmatpush1.msra.mxu0 0.0
    %1307 = vmatprep.subr.mxu0 0.0
    %1308 = vmatpush1.msra.mxu0 0.0
    %1309 = vmatprep.mubr.f32.mxu0 0.0
    %1310 = vmatmul.mubr.f32.gmra.mrb[0].mxu0 %v1150
    %v1311 = vpop.f32.mrb[0].mxu0
    %v1312 = vadd.f32 0.0, %v1311
    %v1313 = vpop.f32.mrb[0].mxu0
    %1314 = vdwg.mxu0
    %1316 = vrot.lane.b32.xlu0 %v1244, 32
    %v1317 = vpop.permute.xlu0 %1316
    %v1318 = vsel %vm161, %v1317, 0
    %1320 = vmatprep.subr.mxu0 0.0
    %1321 = vmatpush1.msra.mxu0 %v63
    %1322 = vmatprep.subr.mxu0 0.0
    %1323 = vmatpush1.msra.mxu0 %v64
    %1324 = vmatprep.subr.mxu0 0.0
    %1325 = vmatpush1.msra.mxu0 %v65
    %1326 = vmatprep.subr.mxu0 0.0
    %1327 = vmatpush1.msra.mxu0 %v66
    %1328 = vmatprep.subr.mxu0 0.0
    %1329 = vmatpush1.msra.mxu0 0.0
    %1330 = vmatprep.subr.mxu0 0.0
    %1331 = vmatpush1.msra.mxu0 0.0
    %1332 = vmatprep.subr.mxu0 0.0
    %1333 = vmatpush1.msra.mxu0 0.0
    %1334 = vmatprep.subr.mxu0 0.0
    %1335 = vmatpush1.msra.mxu0 0.0
    %1336 = vmatprep.subr.mxu0 0.0
    %1337 = vmatpush1.msra.mxu0 0.0
    %1338 = vmatprep.subr.mxu0 0.0
    %1339 = vmatpush1.msra.mxu0 0.0
    %1340 = vmatprep.subr.mxu0 0.0
    %1341 = vmatpush1.msra.mxu0 0.0
    %1342 = vmatprep.subr.mxu0 0.0
    %1343 = vmatpush1.msra.mxu0 0.0
    %1344 = vmatprep.subr.mxu0 0.0
    %1345 = vmatpush1.msra.mxu0 0.0
    %1346 = vmatprep.subr.mxu0 0.0
    %1347 = vmatpush1.msra.mxu0 0.0
    %1348 = vmatprep.subr.mxu0 0.0
    %1349 = vmatpush1.msra.mxu0 0.0
    %1350 = vmatprep.subr.mxu0 0.0
    %1351 = vmatpush1.msra.mxu0 0.0
    %1352 = vmatprep.subr.mxu0 0.0
    %1353 = vmatpush1.msra.mxu0 0.0
    %1354 = vmatprep.subr.mxu0 0.0
    %1355 = vmatpush1.msra.mxu0 0.0
    %1356 = vmatprep.subr.mxu0 0.0
    %1357 = vmatpush1.msra.mxu0 0.0
    %1358 = vmatprep.subr.mxu0 0.0
    %1359 = vmatpush1.msra.mxu0 0.0
    %1360 = vmatprep.subr.mxu0 0.0
    %1361 = vmatpush1.msra.mxu0 0.0
    %1362 = vmatprep.subr.mxu0 0.0
    %1363 = vmatpush1.msra.mxu0 0.0
    %1364 = vmatprep.subr.mxu0 0.0
    %1365 = vmatpush1.msra.mxu0 0.0
    %1366 = vmatprep.subr.mxu0 0.0
    %1367 = vmatpush1.msra.mxu0 0.0
    %1368 = vmatprep.subr.mxu0 0.0
    %1369 = vmatpush1.msra.mxu0 0.0
    %1370 = vmatprep.subr.mxu0 0.0
    %1371 = vmatpush1.msra.mxu0 0.0
    %1372 = vmatprep.subr.mxu0 0.0
    %1373 = vmatpush1.msra.mxu0 0.0
    %1374 = vmatprep.subr.mxu0 0.0
    %1375 = vmatpush1.msra.mxu0 0.0
    %1376 = vmatprep.subr.mxu0 0.0
    %1377 = vmatpush1.msra.mxu0 0.0
    %1378 = vmatprep.subr.mxu0 0.0
    %1379 = vmatpush1.msra.mxu0 0.0
    %1380 = vmatprep.subr.mxu0 0.0
    %1381 = vmatpush1.msra.mxu0 0.0
    %1382 = vmatprep.subr.mxu0 0.0
    %1383 = vmatpush1.msra.mxu0 0.0
    %1384 = vmatprep.mubr.f32.mxu0 0.0
    %1385 = vmatmul.mubr.f32.gmra.mrb[0].mxu0 %v1318
    %v1386 = vpop.f32.mrb[0].mxu0
    %v1387 = vadd.f32 0.0, %v1386
    %v1388 = vpop.f32.mrb[0].mxu0
    %1389 = vdwg.mxu0
    %v1390 = vadd.f32 %v158, %v1312
    %v1391 = vmul.f32 %v1390, 0.5
    %v1392 = vtanh.pop %v1391
    %v1393 = vmul.f32 %v1392, 0.5
    %v1394 = vadd.f32 %v1393, 0.5
    %v1395 = vtanh.pop %v1390
    %v1397 = vrot.slane %v1139, 6
    %v1399 = vmul.f32 %v1394, %v1397
    %1401 = vrot.lane.b32.xlu0 %v1395, 64
    %v1402 = vpop.permute.xlu0 %1401
    %v1404 = vmul.f32 %v1394, %v1402
    %1406 = vrot.lane.b32.xlu0 %v1404, 32
    %v1407 = vpop.permute.xlu0 %1406
    %v1409 = vadd.f32 %v1399, %v1407
    %v1410 = vtanh.pop %v1409
    %1412 = vrot.lane.b32.xlu0 %v1410, 64
    %v1413 = vpop.permute.xlu0 %1412
    %v1415 = vmul.f32 %v1394, %v1413
    %1417 = vrot.lane.b32.xlu0 %v1415, 32
    %v1418 = vpop.permute.xlu0 %1417
    %v1419 = vsel %vm161, %v1418, 0
    %1421 = vmatprep.subr.mxu0 0.0
    %1422 = vmatpush1.msra.mxu0 %v59
    %1423 = vmatprep.subr.mxu0 0.0
    %1424 = vmatpush1.msra.mxu0 %v60
    %1425 = vmatprep.subr.mxu0 0.0
    %1426 = vmatpush1.msra.mxu0 %v61
    %1427 = vmatprep.subr.mxu0 0.0
    %1428 = vmatpush1.msra.mxu0 %v62
    %1429 = vmatprep.subr.mxu0 0.0
    %1430 = vmatpush1.msra.mxu0 0.0
    %1431 = vmatprep.subr.mxu0 0.0
    %1432 = vmatpush1.msra.mxu0 0.0
    %1433 = vmatprep.subr.mxu0 0.0
    %1434 = vmatpush1.msra.mxu0 0.0
    %1435 = vmatprep.subr.mxu0 0.0
    %1436 = vmatpush1.msra.mxu0 0.0
    %1437 = vmatprep.subr.mxu0 0.0
    %1438 = vmatpush1.msra.mxu0 0.0
    %1439 = vmatprep.subr.mxu0 0.0
    %1440 = vmatpush1.msra.mxu0 0.0
    %1441 = vmatprep.subr.mxu0 0.0
    %1442 = vmatpush1.msra.mxu0 0.0
    %1443 = vmatprep.subr.mxu0 0.0
    %1444 = vmatpush1.msra.mxu0 0.0
    %1445 = vmatprep.subr.mxu0 0.0
    %1446 = vmatpush1.msra.mxu0 0.0
    %1447 = vmatprep.subr.mxu0 0.0
    %1448 = vmatpush1.msra.mxu0 0.0
    %1449 = vmatprep.subr.mxu0 0.0
    %1450 = vmatpush1.msra.mxu0 0.0
    %1451 = vmatprep.subr.mxu0 0.0
    %1452 = vmatpush1.msra.mxu0 0.0
    %1453 = vmatprep.subr.mxu0 0.0
    %1454 = vmatpush1.msra.mxu0 0.0
    %1455 = vmatprep.subr.mxu0 0.0
    %1456 = vmatpush1.msra.mxu0 0.0
    %1457 = vmatprep.subr.mxu0 0.0
    %1458 = vmatpush1.msra.mxu0 0.0
    %1459 = vmatprep.subr.mxu0 0.0
    %1460 = vmatpush1.msra.mxu0 0.0
    %1461 = vmatprep.subr.mxu0 0.0
    %1462 = vmatpush1.msra.mxu0 0.0
    %1463 = vmatprep.subr.mxu0 0.0
    %1464 = vmatpush1.msra.mxu0 0.0
    %1465 = vmatprep.subr.mxu0 0.0
    %1466 = vmatpush1.msra.mxu0 0.0
    %1467 = vmatprep.subr.mxu0 0.0
    %1468 = vmatpush1.msra.mxu0 0.0
    %1469 = vmatprep.subr.mxu0 0.0
    %1470 = vmatpush1.msra.mxu0 0.0
    %1471 = vmatprep.subr.mxu0 0.0
    %1472 = vmatpush1.msra.mxu0 0.0
    %1473 = vmatprep.subr.mxu0 0.0
    %1474 = vmatpush1.msra.mxu0 0.0
    %1475 = vmatprep.subr.mxu0 0.0
    %1476 = vmatpush1.msra.mxu0 0.0
    %1477 = vmatprep.subr.mxu0 0.0
    %1478 = vmatpush1.msra.mxu0 0.0
    %1479 = vmatprep.subr.mxu0 0.0
    %1480 = vmatpush1.msra.mxu0 0.0
    %1481 = vmatprep.subr.mxu0 0.0
    %1482 = vmatpush1.msra.mxu0 0.0
    %1483 = vmatprep.subr.mxu0 0.0
    %1484 = vmatpush1.msra.mxu0 0.0
    %1485 = vmatprep.mubr.f32.mxu0 0.0
    %1486 = vmatmul.mubr.f32.gmra.mrb[0].mxu0 %v1419
    %v1487 = vpop.f32.mrb[0].mxu0
    %v1488 = vadd.f32 %v1387, %v1487
    %v1489 = vpop.f32.mrb[0].mxu0
    %1490 = vdwg.mxu0
    %v1491 = vadd.f32 %v1488, %v71
    %v1492 = vmul.f32 %v1491, 0.5
    %v1493 = vtanh.pop %v1492
    %v1494 = vmul.f32 %v1493, 0.5
    %v1495 = vadd.f32 %v1494, 0.5
    %v1496 = vtanh.pop %v1491
    %v1497 = vmul.f32 %v1495, %v1238
    %1499 = vrot.lane.b32.xlu0 %v1496, 64
    %v1500 = vpop.permute.xlu0 %1499
    %v1502 = vmul.f32 %v1495, %v1500
    %1504 = vrot.lane.b32.xlu0 %v1502, 32
    %v1505 = vpop.permute.xlu0 %1504
    %v1507 = vadd.f32 %v1497, %v1505
    %v1508 = vtanh.pop %v1507
    %1510 = vrot.lane.b32.xlu0 %v1508, 64
    %v1511 = vpop.permute.xlu0 %1510
    %v1513 = vmul.f32 %v1495, %v1511
    %1514 = vmatprep.subr.mxu0 0.0
    %1515 = vmatpush1.msra.mxu0 %v55
    %1516 = vmatprep.subr.mxu0 0.0
    %1517 = vmatpush1.msra.mxu0 %v56
    %1518 = vmatprep.subr.mxu0 0.0
    %1519 = vmatpush1.msra.mxu0 %v57
    %1520 = vmatprep.subr.mxu0 0.0
    %1521 = vmatpush1.msra.mxu0 %v58
    %1522 = vmatprep.subr.mxu0 0.0
    %1523 = vmatpush1.msra.mxu0 0.0
    %1524 = vmatprep.subr.mxu0 0.0
    %1525 = vmatpush1.msra.mxu0 0.0
    %1526 = vmatprep.subr.mxu0 0.0
    %1527 = vmatpush1.msra.mxu0 0.0
    %1528 = vmatprep.subr.mxu0 0.0
    %1529 = vmatpush1.msra.mxu0 0.0
    %1530 = vmatprep.subr.mxu0 0.0
    %1531 = vmatpush1.msra.mxu0 0.0
    %1532 = vmatprep.subr.mxu0 0.0
    %1533 = vmatpush1.msra.mxu0 0.0
    %1534 = vmatprep.subr.mxu0 0.0
    %1535 = vmatpush1.msra.mxu0 0.0
    %1536 = vmatprep.subr.mxu0 0.0
    %1537 = vmatpush1.msra.mxu0 0.0
    %1538 = vmatprep.subr.mxu0 0.0
    %1539 = vmatpush1.msra.mxu0 0.0
    %1540 = vmatprep.subr.mxu0 0.0
    %1541 = vmatpush1.msra.mxu0 0.0
    %1542 = vmatprep.subr.mxu0 0.0
    %1543 = vmatpush1.msra.mxu0 0.0
    %1544 = vmatprep.subr.mxu0 0.0
    %1545 = vmatpush1.msra.mxu0 0.0
    %1546 = vmatprep.subr.mxu0 0.0
    %1547 = vmatpush1.msra.mxu0 0.0
    %1548 = vmatprep.subr.mxu0 0.0
    %1549 = vmatpush1.msra.mxu0 0.0
    %1550 = vmatprep.subr.mxu0 0.0
    %1551 = vmatpush1.msra.mxu0 0.0
    %1552 = vmatprep.subr.mxu0 0.0
    %1553 = vmatpush1.msra.mxu0 0.0
    %1554 = vmatprep.subr.mxu0 0.0
    %1555 = vmatpush1.msra.mxu0 0.0
    %1556 = vmatprep.subr.mxu0 0.0
    %1557 = vmatpush1.msra.mxu0 0.0
    %1558 = vmatprep.subr.mxu0 0.0
    %1559 = vmatpush1.msra.mxu0 0.0
    %1560 = vmatprep.subr.mxu0 0.0
    %1561 = vmatpush1.msra.mxu0 0.0
    %1562 = vmatprep.subr.mxu0 0.0
    %1563 = vmatpush1.msra.mxu0 0.0
    %1564 = vmatprep.subr.mxu0 0.0
    %1565 = vmatpush1.msra.mxu0 0.0
    %1566 = vmatprep.subr.mxu0 0.0
    %1567 = vmatpush1.msra.mxu0 0.0
    %1568 = vmatprep.subr.mxu0 0.0
    %1569 = vmatpush1.msra.mxu0 0.0
    %1570 = vmatprep.subr.mxu0 0.0
    %1571 = vmatpush1.msra.mxu0 0.0
    %1572 = vmatprep.subr.mxu0 0.0
    %1573 = vmatpush1.msra.mxu0 0.0
    %1574 = vmatprep.subr.mxu0 0.0
    %1575 = vmatpush1.msra.mxu0 0.0
    %1576 = vmatprep.subr.mxu0 0.0
    %1577 = vmatpush1.msra.mxu0 0.0
    %1578 = vmatprep.mubr.f32.mxu0 0.0
    %1579 = vmatmul.mubr.f32.gmra.mrb[0].mxu0 %v1419
    %v1580 = vpop.f32.mrb[0].mxu0
    %v1581 = vadd.f32 0.0, %v1580
    %v1582 = vpop.f32.mrb[0].mxu0
    %1583 = vdwg.mxu0
    %1585 = vrot.lane.b32.xlu0 %v1513, 32
    %v1586 = vpop.permute.xlu0 %1585
    %v1587 = vsel %vm161, %v1586, 0
    %1589 = vmatprep.subr.mxu0 0.0
    %1590 = vmatpush1.msra.mxu0 %v63
    %1591 = vmatprep.subr.mxu0 0.0
    %1592 = vmatpush1.msra.mxu0 %v64
    %1593 = vmatprep.subr.mxu0 0.0
    %1594 = vmatpush1.msra.mxu0 %v65
    %1595 = vmatprep.subr.mxu0 0.0
    %1596 = vmatpush1.msra.mxu0 %v66
    %1597 = vmatprep.subr.mxu0 0.0
    %1598 = vmatpush1.msra.mxu0 0.0
    %1599 = vmatprep.subr.mxu0 0.0
    %1600 = vmatpush1.msra.mxu0 0.0
    %1601 = vmatprep.subr.mxu0 0.0
    %1602 = vmatpush1.msra.mxu0 0.0
    %1603 = vmatprep.subr.mxu0 0.0
    %1604 = vmatpush1.msra.mxu0 0.0
    %1605 = vmatprep.subr.mxu0 0.0
    %1606 = vmatpush1.msra.mxu0 0.0
    %1607 = vmatprep.subr.mxu0 0.0
    %1608 = vmatpush1.msra.mxu0 0.0
    %1609 = vmatprep.subr.mxu0 0.0
    %1610 = vmatpush1.msra.mxu0 0.0
    %1611 = vmatprep.subr.mxu0 0.0
    %1612 = vmatpush1.msra.mxu0 0.0
    %1613 = vmatprep.subr.mxu0 0.0
    %1614 = vmatpush1.msra.mxu0 0.0
    %1615 = vmatprep.subr.mxu0 0.0
    %1616 = vmatpush1.msra.mxu0 0.0
    %1617 = vmatprep.subr.mxu0 0.0
    %1618 = vmatpush1.msra.mxu0 0.0
    %1619 = vmatprep.subr.mxu0 0.0
    %1620 = vmatpush1.msra.mxu0 0.0
    %1621 = vmatprep.subr.mxu0 0.0
    %1622 = vmatpush1.msra.mxu0 0.0
    %1623 = vmatprep.subr.mxu0 0.0
    %1624 = vmatpush1.msra.mxu0 0.0
    %1625 = vmatprep.subr.mxu0 0.0
    %1626 = vmatpush1.msra.mxu0 0.0
    %1627 = vmatprep.subr.mxu0 0.0
    %1628 = vmatpush1.msra.mxu0 0.0
    %1629 = vmatprep.subr.mxu0 0.0
    %1630 = vmatpush1.msra.mxu0 0.0
    %1631 = vmatprep.subr.mxu0 0.0
    %1632 = vmatpush1.msra.mxu0 0.0
    %1633 = vmatprep.subr.mxu0 0.0
    %1634 = vmatpush1.msra.mxu0 0.0
    %1635 = vmatprep.subr.mxu0 0.0
    %1636 = vmatpush1.msra.mxu0 0.0
    %1637 = vmatprep.subr.mxu0 0.0
    %1638 = vmatpush1.msra.mxu0 0.0
    %1639 = vmatprep.subr.mxu0 0.0
    %1640 = vmatpush1.msra.mxu0 0.0
    %1641 = vmatprep.subr.mxu0 0.0
    %1642 = vmatpush1.msra.mxu0 0.0
    %1643 = vmatprep.subr.mxu0 0.0
    %1644 = vmatpush1.msra.mxu0 0.0
    %1645 = vmatprep.subr.mxu0 0.0
    %1646 = vmatpush1.msra.mxu0 0.0
    %1647 = vmatprep.subr.mxu0 0.0
    %1648 = vmatpush1.msra.mxu0 0.0
    %1649 = vmatprep.subr.mxu0 0.0
    %1650 = vmatpush1.msra.mxu0 0.0
    %1651 = vmatprep.subr.mxu0 0.0
    %1652 = vmatpush1.msra.mxu0 0.0
    %1653 = vmatprep.mubr.f32.mxu0 0.0
    %1654 = vmatmul.mubr.f32.gmra.mrb[0].mxu0 %v1587
    %v1655 = vpop.f32.mrb[0].mxu0
    %v1656 = vadd.f32 0.0, %v1655
    %v1657 = vpop.f32.mrb[0].mxu0
    %1658 = vdwg.mxu0
    %v1660 = vrot.slane %v1581, 6
    %v1662 = vadd.f32 %v158, %v1660
    %v1663 = vmul.f32 %v1662, 0.5
    %v1664 = vtanh.pop %v1663
    %v1665 = vmul.f32 %v1664, 0.5
    %v1666 = vadd.f32 %v1665, 0.5
    %v1667 = vtanh.pop %v1662
    %v1669 = vrot.slane %v1409, 6
    %v1671 = vmul.f32 %v1666, %v1669
    %1673 = vrot.lane.b32.xlu0 %v1667, 64
    %v1674 = vpop.permute.xlu0 %1673
    %v1676 = vmul.f32 %v1666, %v1674
    %1678 = vrot.lane.b32.xlu0 %v1676, 32
    %v1679 = vpop.permute.xlu0 %1678
    %v1681 = vadd.f32 %v1671, %v1679
    %v1682 = vtanh.pop %v1681
    %1684 = vrot.lane.b32.xlu0 %v1682, 64
    %v1685 = vpop.permute.xlu0 %1684
    %v1687 = vmul.f32 %v1666, %v1685
    %v1689 = vrot.slane %v1687, 2
    %1690 = vrot.lane.b32.xlu0 %v1689, 32
    %v1691 = vpop.permute.xlu0 %1690
    %v1692 = vsel %vm161, %v1691, 0
    %1694 = vmatprep.subr.mxu0 0.0
    %1695 = vmatpush1.msra.mxu0 %v59
    %1696 = vmatprep.subr.mxu0 0.0
    %1697 = vmatpush1.msra.mxu0 %v60
    %1698 = vmatprep.subr.mxu0 0.0
    %1699 = vmatpush1.msra.mxu0 %v61
    %1700 = vmatprep.subr.mxu0 0.0
    %1701 = vmatpush1.msra.mxu0 %v62
    %1702 = vmatprep.subr.mxu0 0.0
    %1703 = vmatpush1.msra.mxu0 0.0
    %1704 = vmatprep.subr.mxu0 0.0
    %1705 = vmatpush1.msra.mxu0 0.0
    %1706 = vmatprep.subr.mxu0 0.0
    %1707 = vmatpush1.msra.mxu0 0.0
    %1708 = vmatprep.subr.mxu0 0.0
    %1709 = vmatpush1.msra.mxu0 0.0
    %1710 = vmatprep.subr.mxu0 0.0
    %1711 = vmatpush1.msra.mxu0 0.0
    %1712 = vmatprep.subr.mxu0 0.0
    %1713 = vmatpush1.msra.mxu0 0.0
    %1714 = vmatprep.subr.mxu0 0.0
    %1715 = vmatpush1.msra.mxu0 0.0
    %1716 = vmatprep.subr.mxu0 0.0
    %1717 = vmatpush1.msra.mxu0 0.0
    %1718 = vmatprep.subr.mxu0 0.0
    %1719 = vmatpush1.msra.mxu0 0.0
    %1720 = vmatprep.subr.mxu0 0.0
    %1721 = vmatpush1.msra.mxu0 0.0
    %1722 = vmatprep.subr.mxu0 0.0
    %1723 = vmatpush1.msra.mxu0 0.0
    %1724 = vmatprep.subr.mxu0 0.0
    %1725 = vmatpush1.msra.mxu0 0.0
    %1726 = vmatprep.subr.mxu0 0.0
    %1727 = vmatpush1.msra.mxu0 0.0
    %1728 = vmatprep.subr.mxu0 0.0
    %1729 = vmatpush1.msra.mxu0 0.0
    %1730 = vmatprep.subr.mxu0 0.0
    %1731 = vmatpush1.msra.mxu0 0.0
    %1732 = vmatprep.subr.mxu0 0.0
    %1733 = vmatpush1.msra.mxu0 0.0
    %1734 = vmatprep.subr.mxu0 0.0
    %1735 = vmatpush1.msra.mxu0 0.0
    %1736 = vmatprep.subr.mxu0 0.0
    %1737 = vmatpush1.msra.mxu0 0.0
    %1738 = vmatprep.subr.mxu0 0.0
    %1739 = vmatpush1.msra.mxu0 0.0
    %1740 = vmatprep.subr.mxu0 0.0
    %1741 = vmatpush1.msra.mxu0 0.0
    %1742 = vmatprep.subr.mxu0 0.0
    %1743 = vmatpush1.msra.mxu0 0.0
    %1744 = vmatprep.subr.mxu0 0.0
    %1745 = vmatpush1.msra.mxu0 0.0
    %1746 = vmatprep.subr.mxu0 0.0
    %1747 = vmatpush1.msra.mxu0 0.0
    %1748 = vmatprep.subr.mxu0 0.0
    %1749 = vmatpush1.msra.mxu0 0.0
    %1750 = vmatprep.subr.mxu0 0.0
    %1751 = vmatpush1.msra.mxu0 0.0
    %1752 = vmatprep.subr.mxu0 0.0
    %1753 = vmatpush1.msra.mxu0 0.0
    %1754 = vmatprep.subr.mxu0 0.0
    %1755 = vmatpush1.msra.mxu0 0.0
    %1756 = vmatprep.subr.mxu0 0.0
    %1757 = vmatpush1.msra.mxu0 0.0
    %1758 = vmatprep.mubr.f32.mxu0 0.0
    %1759 = vmatmul.mubr.f32.gmra.mrb[0].mxu0 %v1692
    %v1760 = vpop.f32.mrb[0].mxu0
    %v1761 = vadd.f32 %v1656, %v1760
    %v1762 = vpop.f32.mrb[0].mxu0
    %1763 = vdwg.mxu0
    %v1764 = vadd.f32 %v1761, %v71
    %v1765 = vmul.f32 %v1764, 0.5
    %v1766 = vtanh.pop %v1765
    %v1767 = vmul.f32 %v1766, 0.5
    %v1768 = vadd.f32 %v1767, 0.5
    %v1769 = vtanh.pop %v1764
    %v1770 = vmul.f32 %v1768, %v1507
    %1772 = vrot.lane.b32.xlu0 %v1769, 64
    %v1773 = vpop.permute.xlu0 %1772
    %v1775 = vmul.f32 %v1768, %v1773
    %1777 = vrot.lane.b32.xlu0 %v1775, 32
    %v1778 = vpop.permute.xlu0 %1777
    %v1780 = vadd.f32 %v1770, %v1778
    %v1781 = vtanh.pop %v1780
    %1783 = vrot.lane.b32.xlu0 %v1781, 64
    %v1784 = vpop.permute.xlu0 %1783
    %v1786 = vmul.f32 %v1768, %v1784
    %1787 = vmatprep.subr.mxu0 0.0
    %1788 = vmatpush1.msra.mxu0 %v55
    %1789 = vmatprep.subr.mxu0 0.0
    %1790 = vmatpush1.msra.mxu0 %v56
    %1791 = vmatprep.subr.mxu0 0.0
    %1792 = vmatpush1.msra.mxu0 %v57
    %1793 = vmatprep.subr.mxu0 0.0
    %1794 = vmatpush1.msra.mxu0 %v58
    %1795 = vmatprep.subr.mxu0 0.0
    %1796 = vmatpush1.msra.mxu0 0.0
    %1797 = vmatprep.subr.mxu0 0.0
    %1798 = vmatpush1.msra.mxu0 0.0
    %1799 = vmatprep.subr.mxu0 0.0
    %1800 = vmatpush1.msra.mxu0 0.0
    %1801 = vmatprep.subr.mxu0 0.0
    %1802 = vmatpush1.msra.mxu0 0.0
    %1803 = vmatprep.subr.mxu0 0.0
    %1804 = vmatpush1.msra.mxu0 0.0
    %1805 = vmatprep.subr.mxu0 0.0
    %1806 = vmatpush1.msra.mxu0 0.0
    %1807 = vmatprep.subr.mxu0 0.0
    %1808 = vmatpush1.msra.mxu0 0.0
    %1809 = vmatprep.subr.mxu0 0.0
    %1810 = vmatpush1.msra.mxu0 0.0
    %1811 = vmatprep.subr.mxu0 0.0
    %1812 = vmatpush1.msra.mxu0 0.0
    %1813 = vmatprep.subr.mxu0 0.0
    %1814 = vmatpush1.msra.mxu0 0.0
    %1815 = vmatprep.subr.mxu0 0.0
    %1816 = vmatpush1.msra.mxu0 0.0
    %1817 = vmatprep.subr.mxu0 0.0
    %1818 = vmatpush1.msra.mxu0 0.0
    %1819 = vmatprep.subr.mxu0 0.0
    %1820 = vmatpush1.msra.mxu0 0.0
    %1821 = vmatprep.subr.mxu0 0.0
    %1822 = vmatpush1.msra.mxu0 0.0
    %1823 = vmatprep.subr.mxu0 0.0
    %1824 = vmatpush1.msra.mxu0 0.0
    %1825 = vmatprep.subr.mxu0 0.0
    %1826 = vmatpush1.msra.mxu0 0.0
    %1827 = vmatprep.subr.mxu0 0.0
    %1828 = vmatpush1.msra.mxu0 0.0
    %1829 = vmatprep.subr.mxu0 0.0
    %1830 = vmatpush1.msra.mxu0 0.0
    %1831 = vmatprep.subr.mxu0 0.0
    %1832 = vmatpush1.msra.mxu0 0.0
    %1833 = vmatprep.subr.mxu0 0.0
    %1834 = vmatpush1.msra.mxu0 0.0
    %1835 = vmatprep.subr.mxu0 0.0
    %1836 = vmatpush1.msra.mxu0 0.0
    %1837 = vmatprep.subr.mxu0 0.0
    %1838 = vmatpush1.msra.mxu0 0.0
    %1839 = vmatprep.subr.mxu0 0.0
    %1840 = vmatpush1.msra.mxu0 0.0
    %1841 = vmatprep.subr.mxu0 0.0
    %1842 = vmatpush1.msra.mxu0 0.0
    %1843 = vmatprep.subr.mxu0 0.0
    %1844 = vmatpush1.msra.mxu0 0.0
    %1845 = vmatprep.subr.mxu0 0.0
    %1846 = vmatpush1.msra.mxu0 0.0
    %1847 = vmatprep.subr.mxu0 0.0
    %1848 = vmatpush1.msra.mxu0 0.0
    %1849 = vmatprep.subr.mxu0 0.0
    %1850 = vmatpush1.msra.mxu0 0.0
    %1851 = vmatprep.mubr.f32.mxu0 0.0
    %1852 = vmatmul.mubr.f32.gmra.mrb[0].mxu0 %v1692
    %v1853 = vpop.f32.mrb[0].mxu0
    %v1854 = vadd.f32 0.0, %v1853
    %v1855 = vpop.f32.mrb[0].mxu0
    %1856 = vdwg.mxu0
    %1858 = vrot.lane.b32.xlu0 %v1786, 32
    %v1859 = vpop.permute.xlu0 %1858
    %v1860 = vsel %vm161, %v1859, 0
    %1862 = vmatprep.subr.mxu0 0.0
    %1863 = vmatpush1.msra.mxu0 %v63
    %1864 = vmatprep.subr.mxu0 0.0
    %1865 = vmatpush1.msra.mxu0 %v64
    %1866 = vmatprep.subr.mxu0 0.0
    %1867 = vmatpush1.msra.mxu0 %v65
    %1868 = vmatprep.subr.mxu0 0.0
    %1869 = vmatpush1.msra.mxu0 %v66
    %1870 = vmatprep.subr.mxu0 0.0
    %1871 = vmatpush1.msra.mxu0 0.0
    %1872 = vmatprep.subr.mxu0 0.0
    %1873 = vmatpush1.msra.mxu0 0.0
    %1874 = vmatprep.subr.mxu0 0.0
    %1875 = vmatpush1.msra.mxu0 0.0
    %1876 = vmatprep.subr.mxu0 0.0
    %1877 = vmatpush1.msra.mxu0 0.0
    %1878 = vmatprep.subr.mxu0 0.0
    %1879 = vmatpush1.msra.mxu0 0.0
    %1880 = vmatprep.subr.mxu0 0.0
    %1881 = vmatpush1.msra.mxu0 0.0
    %1882 = vmatprep.subr.mxu0 0.0
    %1883 = vmatpush1.msra.mxu0 0.0
    %1884 = vmatprep.subr.mxu0 0.0
    %1885 = vmatpush1.msra.mxu0 0.0
    %1886 = vmatprep.subr.mxu0 0.0
    %1887 = vmatpush1.msra.mxu0 0.0
    %1888 = vmatprep.subr.mxu0 0.0
    %1889 = vmatpush1.msra.mxu0 0.0
    %1890 = vmatprep.subr.mxu0 0.0
    %1891 = vmatpush1.msra.mxu0 0.0
    %1892 = vmatprep.subr.mxu0 0.0
    %1893 = vmatpush1.msra.mxu0 0.0
    %1894 = vmatprep.subr.mxu0 0.0
    %1895 = vmatpush1.msra.mxu0 0.0
    %1896 = vmatprep.subr.mxu0 0.0
    %1897 = vmatpush1.msra.mxu0 0.0
    %1898 = vmatprep.subr.mxu0 0.0
    %1899 = vmatpush1.msra.mxu0 0.0
    %1900 = vmatprep.subr.mxu0 0.0
    %1901 = vmatpush1.msra.mxu0 0.0
    %1902 = vmatprep.subr.mxu0 0.0
    %1903 = vmatpush1.msra.mxu0 0.0
    %1904 = vmatprep.subr.mxu0 0.0
    %1905 = vmatpush1.msra.mxu0 0.0
    %1906 = vmatprep.subr.mxu0 0.0
    %1907 = vmatpush1.msra.mxu0 0.0
    %1908 = vmatprep.subr.mxu0 0.0
    %1909 = vmatpush1.msra.mxu0 0.0
    %1910 = vmatprep.subr.mxu0 0.0
    %1911 = vmatpush1.msra.mxu0 0.0
    %1912 = vmatprep.subr.mxu0 0.0
    %1913 = vmatpush1.msra.mxu0 0.0
    %1914 = vmatprep.subr.mxu0 0.0
    %1915 = vmatpush1.msra.mxu0 0.0
    %1916 = vmatprep.subr.mxu0 0.0
    %1917 = vmatpush1.msra.mxu0 0.0
    %1918 = vmatprep.subr.mxu0 0.0
    %1919 = vmatpush1.msra.mxu0 0.0
    %1920 = vmatprep.subr.mxu0 0.0
    %1921 = vmatpush1.msra.mxu0 0.0
    %1922 = vmatprep.subr.mxu0 0.0
    %1923 = vmatpush1.msra.mxu0 0.0
    %1924 = vmatprep.subr.mxu0 0.0
    %1925 = vmatpush1.msra.mxu0 0.0
    %1926 = vmatprep.mubr.f32.mxu0 0.0
    %1927 = vmatmul.mubr.f32.gmra.mrb[0].mxu0 %v1860
    %v1928 = vpop.f32.mrb[0].mxu0
    %v1929 = vadd.f32 0.0, %v1928
    %v1930 = vpop.f32.mrb[0].mxu0
    %1931 = vdwg.mxu0
    %v1933 = vrot.slane %v1854, 4
    %v1935 = vadd.f32 %v158, %v1933
    %v1936 = vmul.f32 %v1935, 0.5
    %v1937 = vtanh.pop %v1936
    %v1938 = vmul.f32 %v1937, 0.5
    %v1939 = vadd.f32 %v1938, 0.5
    %v1940 = vtanh.pop %v1935
    %v1942 = vrot.slane %v1681, 6
    %v1944 = vmul.f32 %v1939, %v1942
    %1946 = vrot.lane.b32.xlu0 %v1940, 64
    %v1947 = vpop.permute.xlu0 %1946
    %v1949 = vmul.f32 %v1939, %v1947
    %1951 = vrot.lane.b32.xlu0 %v1949, 32
    %v1952 = vpop.permute.xlu0 %1951
    %v1954 = vadd.f32 %v1944, %v1952
    %v1955 = vtanh.pop %v1954
    %1957 = vrot.lane.b32.xlu0 %v1955, 64
    %v1958 = vpop.permute.xlu0 %1957
    %v1960 = vmul.f32 %v1939, %v1958
    %v1962 = vrot.slane %v1960, 4
    %1963 = vrot.lane.b32.xlu0 %v1962, 32
    %v1964 = vpop.permute.xlu0 %1963
    %v1965 = vsel %vm161, %v1964, 0
    %1967 = vmatprep.subr.mxu0 0.0
    %1968 = vmatpush1.msra.mxu0 %v59
    %1969 = vmatprep.subr.mxu0 0.0
    %1970 = vmatpush1.msra.mxu0 %v60
    %1971 = vmatprep.subr.mxu0 0.0
    %1972 = vmatpush1.msra.mxu0 %v61
    %1973 = vmatprep.subr.mxu0 0.0
    %1974 = vmatpush1.msra.mxu0 %v62
    %1975 = vmatprep.subr.mxu0 0.0
    %1976 = vmatpush1.msra.mxu0 0.0
    %1977 = vmatprep.subr.mxu0 0.0
    %1978 = vmatpush1.msra.mxu0 0.0
    %1979 = vmatprep.subr.mxu0 0.0
    %1980 = vmatpush1.msra.mxu0 0.0
    %1981 = vmatprep.subr.mxu0 0.0
    %1982 = vmatpush1.msra.mxu0 0.0
    %1983 = vmatprep.subr.mxu0 0.0
    %1984 = vmatpush1.msra.mxu0 0.0
    %1985 = vmatprep.subr.mxu0 0.0
    %1986 = vmatpush1.msra.mxu0 0.0
    %1987 = vmatprep.subr.mxu0 0.0
    %1988 = vmatpush1.msra.mxu0 0.0
    %1989 = vmatprep.subr.mxu0 0.0
    %1990 = vmatpush1.msra.mxu0 0.0
    %1991 = vmatprep.subr.mxu0 0.0
    %1992 = vmatpush1.msra.mxu0 0.0
    %1993 = vmatprep.subr.mxu0 0.0
    %1994 = vmatpush1.msra.mxu0 0.0
    %1995 = vmatprep.subr.mxu0 0.0
    %1996 = vmatpush1.msra.mxu0 0.0
    %1997 = vmatprep.subr.mxu0 0.0
    %1998 = vmatpush1.msra.mxu0 0.0
    %1999 = vmatprep.subr.mxu0 0.0
    %2000 = vmatpush1.msra.mxu0 0.0
    %2001 = vmatprep.subr.mxu0 0.0
    %2002 = vmatpush1.msra.mxu0 0.0
    %2003 = vmatprep.subr.mxu0 0.0
    %2004 = vmatpush1.msra.mxu0 0.0
    %2005 = vmatprep.subr.mxu0 0.0
    %2006 = vmatpush1.msra.mxu0 0.0
    %2007 = vmatprep.subr.mxu0 0.0
    %2008 = vmatpush1.msra.mxu0 0.0
    %2009 = vmatprep.subr.mxu0 0.0
    %2010 = vmatpush1.msra.mxu0 0.0
    %2011 = vmatprep.subr.mxu0 0.0
    %2012 = vmatpush1.msra.mxu0 0.0
    %2013 = vmatprep.subr.mxu0 0.0
    %2014 = vmatpush1.msra.mxu0 0.0
    %2015 = vmatprep.subr.mxu0 0.0
    %2016 = vmatpush1.msra.mxu0 0.0
    %2017 = vmatprep.subr.mxu0 0.0
    %2018 = vmatpush1.msra.mxu0 0.0
    %2019 = vmatprep.subr.mxu0 0.0
    %2020 = vmatpush1.msra.mxu0 0.0
    %2021 = vmatprep.subr.mxu0 0.0
    %2022 = vmatpush1.msra.mxu0 0.0
    %2023 = vmatprep.subr.mxu0 0.0
    %2024 = vmatpush1.msra.mxu0 0.0
    %2025 = vmatprep.subr.mxu0 0.0
    %2026 = vmatpush1.msra.mxu0 0.0
    %2027 = vmatprep.subr.mxu0 0.0
    %2028 = vmatpush1.msra.mxu0 0.0
    %2029 = vmatprep.subr.mxu0 0.0
    %2030 = vmatpush1.msra.mxu0 0.0
    %2031 = vmatprep.mubr.f32.mxu0 0.0
    %2032 = vmatmul.mubr.f32.gmra.mrb[0].mxu0 %v1965
    %v2033 = vpop.f32.mrb[0].mxu0
    %v2034 = vadd.f32 %v1929, %v2033
    %v2035 = vpop.f32.mrb[0].mxu0
    %2036 = vdwg.mxu0
    %v2037 = vadd.f32 %v2034, %v71
    %v2038 = vmul.f32 %v2037, 0.5
    %v2039 = vtanh.pop %v2038
    %v2040 = vmul.f32 %v2039, 0.5
    %v2041 = vadd.f32 %v2040, 0.5
    %v2042 = vtanh.pop %v2037
    %v2043 = vmul.f32 %v2041, %v1780
    %2045 = vrot.lane.b32.xlu0 %v2042, 64
    %v2046 = vpop.permute.xlu0 %2045
    %v2048 = vmul.f32 %v2041, %v2046
    %2050 = vrot.lane.b32.xlu0 %v2048, 32
    %v2051 = vpop.permute.xlu0 %2050
    %v2053 = vadd.f32 %v2043, %v2051
    %v2054 = vtanh.pop %v2053
    %2056 = vrot.lane.b32.xlu0 %v2054, 64
    %v2057 = vpop.permute.xlu0 %2056
    %v2059 = vmul.f32 %v2041, %v2057
    %2060 = vmatprep.subr.mxu0 0.0
    %2061 = vmatpush1.msra.mxu0 %v55
    %2062 = vmatprep.subr.mxu0 0.0
    %2063 = vmatpush1.msra.mxu0 %v56
    %2064 = vmatprep.subr.mxu0 0.0
    %2065 = vmatpush1.msra.mxu0 %v57
    %2066 = vmatprep.subr.mxu0 0.0
    %2067 = vmatpush1.msra.mxu0 %v58
    %2068 = vmatprep.subr.mxu0 0.0
    %2069 = vmatpush1.msra.mxu0 0.0
    %2070 = vmatprep.subr.mxu0 0.0
    %2071 = vmatpush1.msra.mxu0 0.0
    %2072 = vmatprep.subr.mxu0 0.0
    %2073 = vmatpush1.msra.mxu0 0.0
    %2074 = vmatprep.subr.mxu0 0.0
    %2075 = vmatpush1.msra.mxu0 0.0
    %2076 = vmatprep.subr.mxu0 0.0
    %2077 = vmatpush1.msra.mxu0 0.0
    %2078 = vmatprep.subr.mxu0 0.0
    %2079 = vmatpush1.msra.mxu0 0.0
    %2080 = vmatprep.subr.mxu0 0.0
    %2081 = vmatpush1.msra.mxu0 0.0
    %2082 = vmatprep.subr.mxu0 0.0
    %2083 = vmatpush1.msra.mxu0 0.0
    %2084 = vmatprep.subr.mxu0 0.0
    %2085 = vmatpush1.msra.mxu0 0.0
    %2086 = vmatprep.subr.mxu0 0.0
    %2087 = vmatpush1.msra.mxu0 0.0
    %2088 = vmatprep.subr.mxu0 0.0
    %2089 = vmatpush1.msra.mxu0 0.0
    %2090 = vmatprep.subr.mxu0 0.0
    %2091 = vmatpush1.msra.mxu0 0.0
    %2092 = vmatprep.subr.mxu0 0.0
    %2093 = vmatpush1.msra.mxu0 0.0
    %2094 = vmatprep.subr.mxu0 0.0
    %2095 = vmatpush1.msra.mxu0 0.0
    %2096 = vmatprep.subr.mxu0 0.0
    %2097 = vmatpush1.msra.mxu0 0.0
    %2098 = vmatprep.subr.mxu0 0.0
    %2099 = vmatpush1.msra.mxu0 0.0
    %2100 = vmatprep.subr.mxu0 0.0
    %2101 = vmatpush1.msra.mxu0 0.0
    %2102 = vmatprep.subr.mxu0 0.0
    %2103 = vmatpush1.msra.mxu0 0.0
    %2104 = vmatprep.subr.mxu0 0.0
    %2105 = vmatpush1.msra.mxu0 0.0
    %2106 = vmatprep.subr.mxu0 0.0
    %2107 = vmatpush1.msra.mxu0 0.0
    %2108 = vmatprep.subr.mxu0 0.0
    %2109 = vmatpush1.msra.mxu0 0.0
    %2110 = vmatprep.subr.mxu0 0.0
    %2111 = vmatpush1.msra.mxu0 0.0
    %2112 = vmatprep.subr.mxu0 0.0
    %2113 = vmatpush1.msra.mxu0 0.0
    %2114 = vmatprep.subr.mxu0 0.0
    %2115 = vmatpush1.msra.mxu0 0.0
    %2116 = vmatprep.subr.mxu0 0.0
    %2117 = vmatpush1.msra.mxu0 0.0
    %2118 = vmatprep.subr.mxu0 0.0
    %2119 = vmatpush1.msra.mxu0 0.0
    %2120 = vmatprep.subr.mxu0 0.0
    %2121 = vmatpush1.msra.mxu0 0.0
    %2122 = vmatprep.subr.mxu0 0.0
    %2123 = vmatpush1.msra.mxu0 0.0
    %2124 = vmatprep.mubr.f32.mxu0 0.0
    %2125 = vmatmul.mubr.f32.gmra.mrb[0].mxu0 %v1965
    %v2126 = vpop.f32.mrb[0].mxu0
    %v2127 = vadd.f32 0.0, %v2126
    %v2128 = vpop.f32.mrb[0].mxu0
    %2129 = vdwg.mxu0
    %2131 = vrot.lane.b32.xlu0 %v2059, 32
    %v2132 = vpop.permute.xlu0 %2131
    %v2133 = vsel %vm161, %v2132, 0
    %2135 = vmatprep.subr.mxu0 0.0
    %2136 = vmatpush1.msra.mxu0 %v63
    %2137 = vmatprep.subr.mxu0 0.0
    %2138 = vmatpush1.msra.mxu0 %v64
    %2139 = vmatprep.subr.mxu0 0.0
    %2140 = vmatpush1.msra.mxu0 %v65
    %2141 = vmatprep.subr.mxu0 0.0
    %2142 = vmatpush1.msra.mxu0 %v66
    %2143 = vmatprep.subr.mxu0 0.0
    %2144 = vmatpush1.msra.mxu0 0.0
    %2145 = vmatprep.subr.mxu0 0.0
    %2146 = vmatpush1.msra.mxu0 0.0
    %2147 = vmatprep.subr.mxu0 0.0
    %2148 = vmatpush1.msra.mxu0 0.0
    %2149 = vmatprep.subr.mxu0 0.0
    %2150 = vmatpush1.msra.mxu0 0.0
    %2151 = vmatprep.subr.mxu0 0.0
    %2152 = vmatpush1.msra.mxu0 0.0
    %2153 = vmatprep.subr.mxu0 0.0
    %2154 = vmatpush1.msra.mxu0 0.0
    %2155 = vmatprep.subr.mxu0 0.0
    %2156 = vmatpush1.msra.mxu0 0.0
    %2157 = vmatprep.subr.mxu0 0.0
    %2158 = vmatpush1.msra.mxu0 0.0
    %2159 = vmatprep.subr.mxu0 0.0
    %2160 = vmatpush1.msra.mxu0 0.0
    %2161 = vmatprep.subr.mxu0 0.0
    %2162 = vmatpush1.msra.mxu0 0.0
    %2163 = vmatprep.subr.mxu0 0.0
    %2164 = vmatpush1.msra.mxu0 0.0
    %2165 = vmatprep.subr.mxu0 0.0
    %2166 = vmatpush1.msra.mxu0 0.0
    %2167 = vmatprep.subr.mxu0 0.0
    %2168 = vmatpush1.msra.mxu0 0.0
    %2169 = vmatprep.subr.mxu0 0.0
    %2170 = vmatpush1.msra.mxu0 0.0
    %2171 = vmatprep.subr.mxu0 0.0
    %2172 = vmatpush1.msra.mxu0 0.0
    %2173 = vmatprep.subr.mxu0 0.0
    %2174 = vmatpush1.msra.mxu0 0.0
    %2175 = vmatprep.subr.mxu0 0.0
    %2176 = vmatpush1.msra.mxu0 0.0
    %2177 = vmatprep.subr.mxu0 0.0
    %2178 = vmatpush1.msra.mxu0 0.0
    %2179 = vmatprep.subr.mxu0 0.0
    %2180 = vmatpush1.msra.mxu0 0.0
    %2181 = vmatprep.subr.mxu0 0.0
    %2182 = vmatpush1.msra.mxu0 0.0
    %2183 = vmatprep.subr.mxu0 0.0
    %2184 = vmatpush1.msra.mxu0 0.0
    %2185 = vmatprep.subr.mxu0 0.0
    %2186 = vmatpush1.msra.mxu0 0.0
    %2187 = vmatprep.subr.mxu0 0.0
    %2188 = vmatpush1.msra.mxu0 0.0
    %2189 = vmatprep.subr.mxu0 0.0
    %2190 = vmatpush1.msra.mxu0 0.0
    %2191 = vmatprep.subr.mxu0 0.0
    %2192 = vmatpush1.msra.mxu0 0.0
    %2193 = vmatprep.subr.mxu0 0.0
    %2194 = vmatpush1.msra.mxu0 0.0
    %2195 = vmatprep.subr.mxu0 0.0
    %2196 = vmatpush1.msra.mxu0 0.0
    %2197 = vmatprep.subr.mxu0 0.0
    %2198 = vmatpush1.msra.mxu0 0.0
    %2199 = vmatprep.mubr.f32.mxu0 0.0
    %2200 = vmatmul.mubr.f32.gmra.mrb[0].mxu0 %v2133
    %v2201 = vpop.f32.mrb[0].mxu0
    %v2202 = vadd.f32 0.0, %v2201
    %v2203 = vpop.f32.mrb[0].mxu0
    %2204 = vdwg.mxu0
    %v2206 = vrot.slane %v2127, 2
    %v2208 = vadd.f32 %v158, %v2206
    %v2209 = vmul.f32 %v2208, 0.5
    %v2210 = vtanh.pop %v2209
    %v2211 = vmul.f32 %v2210, 0.5
    %v2212 = vadd.f32 %v2211, 0.5
    %v2213 = vtanh.pop %v2208
    %v2215 = vrot.slane %v1954, 6
    %v2217 = vmul.f32 %v2212, %v2215
    %2219 = vrot.lane.b32.xlu0 %v2213, 64
    %v2220 = vpop.permute.xlu0 %2219
    %v2222 = vmul.f32 %v2212, %v2220
    %2224 = vrot.lane.b32.xlu0 %v2222, 32
    %v2225 = vpop.permute.xlu0 %2224
    %v2227 = vadd.f32 %v2217, %v2225
    %v2228 = vtanh.pop %v2227
    %2230 = vrot.lane.b32.xlu0 %v2228, 64
    %v2231 = vpop.permute.xlu0 %2230
    %v2233 = vmul.f32 %v2212, %v2231
    %v2235 = vrot.slane %v2233, 6
    %2236 = vrot.lane.b32.xlu0 %v2235, 32
    %v2237 = vpop.permute.xlu0 %2236
    %v2238 = vsel %vm161, %v2237, 0
    %2240 = vmatprep.subr.mxu0 0.0
    %2241 = vmatpush1.msra.mxu0 %v59
    %2242 = vmatprep.subr.mxu0 0.0
    %2243 = vmatpush1.msra.mxu0 %v60
    %2244 = vmatprep.subr.mxu0 0.0
    %2245 = vmatpush1.msra.mxu0 %v61
    %2246 = vmatprep.subr.mxu0 0.0
    %2247 = vmatpush1.msra.mxu0 %v62
    %2248 = vmatprep.subr.mxu0 0.0
    %2249 = vmatpush1.msra.mxu0 0.0
    %2250 = vmatprep.subr.mxu0 0.0
    %2251 = vmatpush1.msra.mxu0 0.0
    %2252 = vmatprep.subr.mxu0 0.0
    %2253 = vmatpush1.msra.mxu0 0.0
    %2254 = vmatprep.subr.mxu0 0.0
    %2255 = vmatpush1.msra.mxu0 0.0
    %2256 = vmatprep.subr.mxu0 0.0
    %2257 = vmatpush1.msra.mxu0 0.0
    %2258 = vmatprep.subr.mxu0 0.0
    %2259 = vmatpush1.msra.mxu0 0.0
    %2260 = vmatprep.subr.mxu0 0.0
    %2261 = vmatpush1.msra.mxu0 0.0
    %2262 = vmatprep.subr.mxu0 0.0
    %2263 = vmatpush1.msra.mxu0 0.0
    %2264 = vmatprep.subr.mxu0 0.0
    %2265 = vmatpush1.msra.mxu0 0.0
    %2266 = vmatprep.subr.mxu0 0.0
    %2267 = vmatpush1.msra.mxu0 0.0
    %2268 = vmatprep.subr.mxu0 0.0
    %2269 = vmatpush1.msra.mxu0 0.0
    %2270 = vmatprep.subr.mxu0 0.0
    %2271 = vmatpush1.msra.mxu0 0.0
    %2272 = vmatprep.subr.mxu0 0.0
    %2273 = vmatpush1.msra.mxu0 0.0
    %2274 = vmatprep.subr.mxu0 0.0
    %2275 = vmatpush1.msra.mxu0 0.0
    %2276 = vmatprep.subr.mxu0 0.0
    %2277 = vmatpush1.msra.mxu0 0.0
    %2278 = vmatprep.subr.mxu0 0.0
    %2279 = vmatpush1.msra.mxu0 0.0
    %2280 = vmatprep.subr.mxu0 0.0
    %2281 = vmatpush1.msra.mxu0 0.0
    %2282 = vmatprep.subr.mxu0 0.0
    %2283 = vmatpush1.msra.mxu0 0.0
    %2284 = vmatprep.subr.mxu0 0.0
    %2285 = vmatpush1.msra.mxu0 0.0
    %2286 = vmatprep.subr.mxu0 0.0
    %2287 = vmatpush1.msra.mxu0 0.0
    %2288 = vmatprep.subr.mxu0 0.0
    %2289 = vmatpush1.msra.mxu0 0.0
    %2290 = vmatprep.subr.mxu0 0.0
    %2291 = vmatpush1.msra.mxu0 0.0
    %2292 = vmatprep.subr.mxu0 0.0
    %2293 = vmatpush1.msra.mxu0 0.0
    %2294 = vmatprep.subr.mxu0 0.0
    %2295 = vmatpush1.msra.mxu0 0.0
    %2296 = vmatprep.subr.mxu0 0.0
    %2297 = vmatpush1.msra.mxu0 0.0
    %2298 = vmatprep.subr.mxu0 0.0
    %2299 = vmatpush1.msra.mxu0 0.0
    %2300 = vmatprep.subr.mxu0 0.0
    %2301 = vmatpush1.msra.mxu0 0.0
    %2302 = vmatprep.subr.mxu0 0.0
    %2303 = vmatpush1.msra.mxu0 0.0
    %2304 = vmatprep.mubr.f32.mxu0 0.0
    %2305 = vmatmul.mubr.f32.gmra.mrb[0].mxu0 %v2238
    %v2306 = vpop.f32.mrb[0].mxu0
    %v2307 = vadd.f32 %v2202, %v2306
    %v2308 = vpop.f32.mrb[0].mxu0
    %2309 = vdwg.mxu0
    %v2310 = vadd.f32 %v2307, %v71
    %v2311 = vmul.f32 %v2310, 0.5
    %v2312 = vtanh.pop %v2311
    %v2313 = vmul.f32 %v2312, 0.5
    %v2314 = vadd.f32 %v2313, 0.5
    %v2315 = vtanh.pop %v2310
    %v2316 = vmul.f32 %v2314, %v2053
    %2318 = vrot.lane.b32.xlu0 %v2315, 64
    %v2319 = vpop.permute.xlu0 %2318
    %v2321 = vmul.f32 %v2314, %v2319
    %2323 = vrot.lane.b32.xlu0 %v2321, 32
    %v2324 = vpop.permute.xlu0 %2323
    %v2326 = vadd.f32 %v2316, %v2324
    %v2327 = vtanh.pop %v2326
    %2329 = vrot.lane.b32.xlu0 %v2327, 64
    %v2330 = vpop.permute.xlu0 %2329
    %v2332 = vmul.f32 %v2314, %v2330
    %v2333 = vld [vmem:[#allocation6 + $0x3] sm:$0x1]
    %v2334 = vld [vmem:[#allocation6 + $0x2] sm:$0x1]
    %v2335 = vlaneseq
    %v2336 = vshrl.u32 %v2335, 7
    %v2337 = vsub.s32 0, %v2336
    %v2338 = vrot.slane %v2334, %v2337
    %2340 = vrot.lane.b32.xlu0 %v2338, 96
    %v2341 = vpop.permute.xlu0 %2340
    %v2343 = vmul.f32 %v2332, %v2341
    %2345 = vrot.lane.b32.xlu0 %v2343, 32
    %v2346 = vpop.permute.xlu0 %2345
    %vm2348 = vcmask 254976
    %v2349 = vsel %vm2348, %v2346, 0.0
    %2350 = vadd.xlane.f32.xlu0 %v2349
    %v2351 = vpop.xlane.xlu0 %2350
    %v2352 = vlaneseq
    %v2353 = vshrl.u32 %v2352, 7
    %v2354 = vsub.s32 0, %v2353
    %v2355 = vrot.slane %v2333, %v2354
    %v2356 = vadd.f32 %v2351, %v2355
    %vm2357 = vcmask 1024
    %2358 = vst.msk [vmem:[%s3] sm:$0x3] %vm2357, %v2356
    // Predicated region
    $region26: #{tpu_custom_call.1} parent=1 // pred_check
      _
    $region27: #{tpu_custom_call.1} parent=1 // pred_check_branch
      %2360 = sbr.rel (0) target = $region29
    $region28: #{tpu_custom_call.1} parent=1 // pred_region
      _
    $region29: #{tpu_custom_call.1} parent=1 // pred_fallthru
      _
    // Predicated region
    $region30: #{tpu_custom_call.1} parent=1 // pred_check
      _
    $region31: #{tpu_custom_call.1} parent=1 // pred_check_branch
      %2362 = sbr.rel (0) target = $region33
    $region32: #{tpu_custom_call.1} parent=1 // pred_region
      _
    $region33: #{tpu_custom_call.1} parent=1 // pred_fallthru
      _
    %2363 = vsyncpa [#allocation3], 1
    %2364 = vsyncpa [#allocation5], 1

</llo_original>
